<compile_context>
chip_gen: v5e
topology: v5e:2x2
jax: 0.10.0
libtpu: 0.0.40
codegen_flags: <defaults>
</compile_context>

<pallas_src>
import jax
import jax.numpy as jnp
import numpy as np
from jax.experimental import pallas as pl
from jax.experimental.pallas import tpu as pltpu

FILTERS = [3, 4, 5]
FILTER_NUM = [100, 100, 100]
F_PAD = 128                       # per-branch channel count padded to full lanes
FMAX = max(FILTERS)               # 5
CW = len(FILTERS) * F_PAD         # 384: fused (padded) conv feature width


def make_net_kernel(TB, S, D, N_PAD):
    """Kernel body for one batch tile of TB rows."""

    def kernel(x_ref, wconv_ref, bm_ref, whead_ref, bhead_ref,
               logits_ref, norm_ref):
        x = x_ref[...]                                   # (TB, S, D) bf16

        # Fused conv as accumulated shifted matmuls (no im2col slab).
        # Shift j: position p reads token (p + j) mod S.  Wrapped reads only
        # reach positions that are invalid for every branch using that shift,
        # and those positions are masked with -1e30 below.
        acc = jnp.dot(x.reshape(TB * S, D), wconv_ref[0:D, :],
                      preferred_element_type=jnp.float32)
        for j in range(1, FMAX):
            xj = jnp.concatenate([x[:, j:, :], x[:, :j, :]], axis=1)
            acc = acc + jnp.dot(xj.reshape(TB * S, D),
                                wconv_ref[j * D:(j + 1) * D, :],
                                preferred_element_type=jnp.float32)

        # Fused bias + validity mask (valid: +bias, invalid: -1e30), then ReLU.
        # ReLU clamps invalid positions to 0, which is inert under the max-pool
        # because valid ReLU'd scores are >= 0 (see INVARIANT note above).
        scores = acc.reshape(TB, S, CW) + bm_ref[...]
        scores = jnp.maximum(scores, 0.0)
        h = jnp.max(scores, axis=1)                      # (TB, 384) max over positions

        # TODO(synk): nn.Dropout(0.5) is identity at inference time; omitted.

        # All task heads fused into one bf16 matmul; lane-dense (TB, 128) output.
        logits_ref[...] = (jnp.dot(h.astype(jnp.bfloat16), whead_ref[...],
                                   preferred_element_type=jnp.float32)
                           + bhead_ref[...])

        # F.normalize(h, dim=1), eps=1e-12  ==  h * rsqrt(max(||h||^2, 1e-24));
        # zero-padded channel lanes contribute nothing to the norm.
        ss = jnp.sum(h * h, axis=1, keepdims=True)
        norm_ref[...] = h * jax.lax.rsqrt(jnp.maximum(ss, 1e-24))

    return kernel


def _build_fused_params(conv_torch, head_torch, S, D):
    """Zero-pad / fuse the PyTorch-layout params into MXU-friendly slabs."""
    KF = FMAX * D

    W_conv = np.zeros((KF, CW), np.float32)
    # Additive bias+mask slab: valid positions get the conv bias, everything
    # else (invalid positions AND padded channel lanes) gets -1e30.
    bm = np.full((S, CW), -1e30, np.float32)
    for i, f in enumerate(FILTERS):
        w_t, b_t = conv_torch[i]                         # (100, f*D), (100,) torch Conv1d layout
        w_np = np.asarray(w_t, np.float32)
        W_conv[:f * D, i * F_PAD:i * F_PAD + FILTER_NUM[i]] = w_np.T
        bm[:S - f + 1, i * F_PAD:i * F_PAD + FILTER_NUM[i]] = \
            np.asarray(b_t, np.float32)[None, :]

    n_list = [int(np.asarray(w).shape[0]) for (w, _) in head_torch]
    N_total = sum(n_list)
    N_PAD = max(128, ((N_total + 127) // 128) * 128)
    W_head = np.zeros((CW, N_PAD), np.float32)
    b_head = np.zeros((1, N_PAD), np.float32)
    foff = np.cumsum([0] + FILTER_NUM)
    col = 0
    for (w_t, b_t) in head_torch:                        # (n, 300), (n,)
        w_np = np.asarray(w_t, np.float32)
        n = w_np.shape[0]
        for i in range(len(FILTERS)):
            W_head[i * F_PAD:i * F_PAD + FILTER_NUM[i], col:col + n] = \
                w_np[:, foff[i]:foff[i + 1]].T
        b_head[0, col:col + n] = np.asarray(b_t, np.float32)
        col += n

    return (jnp.asarray(W_conv, jnp.bfloat16), jnp.asarray(bm),
            jnp.asarray(W_head, jnp.bfloat16), jnp.asarray(b_head),
            n_list, N_PAD)


def net_forward(seq_out, conv_torch, head_torch, tile_b=8):
    """seq_out: (B, S, D).  conv/head params in PyTorch layouts."""
    B, S, D = seq_out.shape
    W_conv, bm, W_head, b_head, n_list, N_PAD = \
        _build_fused_params(conv_torch, head_torch, S, D)

    TB = tile_b
    B_pad = ((B + TB - 1) // TB) * TB        # sublane-aligned batch tiles
    x = seq_out.astype(jnp.bfloat16)         # bf16 MXU inputs, f32 accumulation
    if B_pad != B:
        x = jnp.pad(x, ((0, B_pad - B), (0, 0), (0, 0)))
    G = B_pad // TB

    kernel = make_net_kernel(TB, S, D, N_PAD)
    grid_spec = pltpu.PrefetchScalarGridSpec(
        num_scalar_prefetch=0,
        grid=(G,),
        in_specs=[
            pl.BlockSpec((TB, S, D), lambda b: (b, 0, 0)),        # activations
            pl.BlockSpec((FMAX * D, CW), lambda b: (0, 0)),       # fused conv W (pinned)
            pl.BlockSpec((S, CW), lambda b: (0, 0)),              # bias+mask slab (pinned)
            pl.BlockSpec((CW, N_PAD), lambda b: (0, 0)),          # fused head W (pinned)
            pl.BlockSpec((1, N_PAD), lambda b: (0, 0)),           # fused head b (pinned)
        ],
        out_specs=[
            pl.BlockSpec((TB, N_PAD), lambda b: (b, 0)),
            pl.BlockSpec((TB, CW), lambda b: (b, 0)),
        ],
    )
    logits_slab, norm_slab = pl.pallas_call(
        kernel,
        out_shape=(jax.ShapeDtypeStruct((B_pad, N_PAD), jnp.float32),
                   jax.ShapeDtypeStruct((B_pad, CW), jnp.float32)),
        grid_spec=grid_spec,
        compiler_params=pltpu.CompilerParams(
            dimension_semantics=("parallel",),
            vmem_limit_bytes=32 * 1024 * 1024),
    )(x, W_conv, bm, W_head, b_head)

    # Wrapper-side slicing back to PyTorch shapes (cheap XLA layout work).
    y, col = [], 0
    for n in n_list:
        y.append(logits_slab[:B, col:col + n])
        col += n
    normalized = jnp.concatenate(
        [norm_slab[:B, i * F_PAD:i * F_PAD + FILTER_NUM[i]]
         for i in range(len(FILTERS))], axis=1)
    return {'y': y, 'normalized_pooled_rep': normalized}


def ref_forward(seq_out, conv_torch, head_torch):
    """Plain-JAX f32 reference mirroring the PyTorch forward exactly."""
    B, S, D = seq_out.shape
    hflat = seq_out.reshape(B, S * D)
    feats = []
    for (w, b), f in zip(conv_torch, FILTERS):           # w: (F, f*D) torch layout
        P = S - f + 1
        wins = jnp.stack([hflat[:, p * D:p * D + f * D] for p in range(P)], axis=1)
        sc = jnp.einsum('bpk,ck->bpc', wins, w) + b
        sc = jnp.maximum(sc, 0.0)
        feats.append(jnp.max(sc, axis=1))
    h = jnp.concatenate(feats, axis=1)
    ys = [h @ w.T + b for (w, b) in head_torch]
    nrm = h / jnp.maximum(jnp.linalg.norm(h, axis=1, keepdims=True), 1e-12)
    return ys, nrm


if __name__ == "__main__":
    key = jax.random.PRNGKey(0)
    B, S, D = 2, 8, 32                 # batch, max_seq_length, bert_hidden_size
    taskcla = [(0, 3), (1, 5)]         # 'til' scenario: one linear head per task

    keys = jax.random.split(key, 16)
    seq_out = jax.random.normal(keys[0], (B, S, D), jnp.float32)

    conv_torch = []
    for i, f in enumerate(FILTERS):
        w_t = jax.random.normal(keys[1 + 2 * i], (FILTER_NUM[i], f * D), jnp.float32) * 0.05
        b_t = jax.random.normal(keys[2 + 2 * i], (FILTER_NUM[i],), jnp.float32) * 0.05
        conv_torch.append((w_t, b_t))

    head_torch = []
    for t, n in taskcla:
        wl = jax.random.normal(keys[8 + 2 * t], (n, sum(FILTER_NUM)), jnp.float32) * 0.05
        bl = jax.random.normal(keys[9 + 2 * t], (n,), jnp.float32) * 0.05
        head_torch.append((wl, bl))

    out = net_forward(seq_out, conv_torch, head_torch)
    jax.block_until_ready(out)

    # bf16 MXU inputs vs. f32 reference -> looser tolerance than before.
    ys_ref, norm_ref_v = ref_forward(seq_out, conv_torch, head_torch)
    for y_k, y_r in zip(out['y'], ys_ref):
        np.testing.assert_allclose(np.asarray(y_k), np.asarray(y_r),
                                   rtol=2e-2, atol=2e-2)
    np.testing.assert_allclose(np.asarray(out['normalized_pooled_rep']),
                               np.asarray(norm_ref_v), rtol=2e-2, atol=2e-2)

    print("KERNEL_OK")
</pallas_src>

<mosaic_0001>
module attributes {stable_mosaic.version = 11 : i64} {
  func.func @kernel(%arg0: i32, %arg1: memref<8x8x32xbf16, #tpu.memory_space<vmem>>, %arg2: memref<160x384xbf16, #tpu.memory_space<vmem>>, %arg3: memref<8x384xf32, #tpu.memory_space<vmem>>, %arg4: memref<384x128xbf16, #tpu.memory_space<vmem>>, %arg5: memref<1x128xf32, #tpu.memory_space<vmem>>, %arg6: memref<8x128xf32, #tpu.memory_space<vmem>>, %arg7: memref<8x384xf32, #tpu.memory_space<vmem>>) attributes {dimension_semantics = [#tpu.dimension_semantics<parallel>], iteration_bounds = array<i64: 1>, scalar_prefetch = 0 : i64, scratch_operands = 0 : i64, tpu.core_type = #tpu.core_type<tc>, window_params = [{transform_indices = @transform_0, window_bounds = array<i64: 8, 8, 32>}, {pipeline_mode = #tpu.pipeline_mode<synchronous>, transform_indices = @transform_1, window_bounds = array<i64: 160, 384>}, {pipeline_mode = #tpu.pipeline_mode<synchronous>, transform_indices = @transform_2, window_bounds = array<i64: 8, 384>}, {pipeline_mode = #tpu.pipeline_mode<synchronous>, transform_indices = @transform_3, window_bounds = array<i64: 384, 128>}, {pipeline_mode = #tpu.pipeline_mode<synchronous>, transform_indices = @transform_4, window_bounds = array<i64: 1, 128>}, {transform_indices = @transform_5, window_bounds = array<i64: 8, 128>}, {transform_indices = @transform_6, window_bounds = array<i64: 8, 384>}]} {
    %c0 = arith.constant 0 : index
    %c0_0 = arith.constant 0 : index
    %c0_1 = arith.constant 0 : index
    %0 = vector.load %arg1[%c0, %c0_0, %c0_1] : memref<8x8x32xbf16, #tpu.memory_space<vmem>>, vector<8x8x32xbf16>
    %1 = vector.shape_cast %0 : vector<8x8x32xbf16> to vector<64x32xbf16>
    %c0_2 = arith.constant 0 : index
    %c0_3 = arith.constant 0 : index
    %2 = vector.load %arg2[%c0_2, %c0_3] : memref<160x384xbf16, #tpu.memory_space<vmem>>, vector<32x384xbf16>
    %cst = arith.constant dense<0.000000e+00> : vector<64x384xf32>
    %3 = tpu.matmul %1, %2, %cst {dimension_numbers = #tpu.dot_dimension_numbers<[1], [0], [0], [1], [0, 0, 1, 1], [], []>} : vector<64x32xbf16>, vector<32x384xbf16>, vector<64x384xf32> -> vector<64x384xf32>
    %4 = vector.extract_strided_slice %0 {offsets = [0, 1, 0], sizes = [8, 7, 32], strides = [1, 1, 1]} : vector<8x8x32xbf16> to vector<8x7x32xbf16>
    %5 = vector.extract_strided_slice %0 {offsets = [0, 0, 0], sizes = [8, 1, 32], strides = [1, 1, 1]} : vector<8x8x32xbf16> to vector<8x1x32xbf16>
    %6 = tpu.concatenate %4, %5 in 1 : vector<8x7x32xbf16>, vector<8x1x32xbf16> -> vector<8x8x32xbf16>
    %7 = vector.shape_cast %6 : vector<8x8x32xbf16> to vector<64x32xbf16>
    %c32 = arith.constant 32 : index
    %c0_4 = arith.constant 0 : index
    %8 = vector.load %arg2[%c32, %c0_4] : memref<160x384xbf16, #tpu.memory_space<vmem>>, vector<32x384xbf16>
    %cst_5 = arith.constant dense<0.000000e+00> : vector<64x384xf32>
    %9 = tpu.matmul %7, %8, %cst_5 {dimension_numbers = #tpu.dot_dimension_numbers<[1], [0], [0], [1], [0, 0, 1, 1], [], []>} : vector<64x32xbf16>, vector<32x384xbf16>, vector<64x384xf32> -> vector<64x384xf32>
    %10 = arith.addf %3, %9 : vector<64x384xf32>
    %11 = vector.extract_strided_slice %0 {offsets = [0, 2, 0], sizes = [8, 6, 32], strides = [1, 1, 1]} : vector<8x8x32xbf16> to vector<8x6x32xbf16>
    %12 = vector.extract_strided_slice %0 {offsets = [0, 0, 0], sizes = [8, 2, 32], strides = [1, 1, 1]} : vector<8x8x32xbf16> to vector<8x2x32xbf16>
    %13 = tpu.concatenate %11, %12 in 1 : vector<8x6x32xbf16>, vector<8x2x32xbf16> -> vector<8x8x32xbf16>
    %14 = vector.shape_cast %13 : vector<8x8x32xbf16> to vector<64x32xbf16>
    %c64 = arith.constant 64 : index
    %c0_6 = arith.constant 0 : index
    %15 = vector.load %arg2[%c64, %c0_6] : memref<160x384xbf16, #tpu.memory_space<vmem>>, vector<32x384xbf16>
    %cst_7 = arith.constant dense<0.000000e+00> : vector<64x384xf32>
    %16 = tpu.matmul %14, %15, %cst_7 {dimension_numbers = #tpu.dot_dimension_numbers<[1], [0], [0], [1], [0, 0, 1, 1], [], []>} : vector<64x32xbf16>, vector<32x384xbf16>, vector<64x384xf32> -> vector<64x384xf32>
    %17 = arith.addf %10, %16 : vector<64x384xf32>
    %18 = vector.extract_strided_slice %0 {offsets = [0, 3, 0], sizes = [8, 5, 32], strides = [1, 1, 1]} : vector<8x8x32xbf16> to vector<8x5x32xbf16>
    %19 = vector.extract_strided_slice %0 {offsets = [0, 0, 0], sizes = [8, 3, 32], strides = [1, 1, 1]} : vector<8x8x32xbf16> to vector<8x3x32xbf16>
    %20 = tpu.concatenate %18, %19 in 1 : vector<8x5x32xbf16>, vector<8x3x32xbf16> -> vector<8x8x32xbf16>
    %21 = vector.shape_cast %20 : vector<8x8x32xbf16> to vector<64x32xbf16>
    %c96 = arith.constant 96 : index
    %c0_8 = arith.constant 0 : index
    %22 = vector.load %arg2[%c96, %c0_8] : memref<160x384xbf16, #tpu.memory_space<vmem>>, vector<32x384xbf16>
    %cst_9 = arith.constant dense<0.000000e+00> : vector<64x384xf32>
    %23 = tpu.matmul %21, %22, %cst_9 {dimension_numbers = #tpu.dot_dimension_numbers<[1], [0], [0], [1], [0, 0, 1, 1], [], []>} : vector<64x32xbf16>, vector<32x384xbf16>, vector<64x384xf32> -> vector<64x384xf32>
    %24 = arith.addf %17, %23 : vector<64x384xf32>
    %25 = vector.extract_strided_slice %0 {offsets = [0, 4, 0], sizes = [8, 4, 32], strides = [1, 1, 1]} : vector<8x8x32xbf16> to vector<8x4x32xbf16>
    %26 = vector.extract_strided_slice %0 {offsets = [0, 0, 0], sizes = [8, 4, 32], strides = [1, 1, 1]} : vector<8x8x32xbf16> to vector<8x4x32xbf16>
    %27 = tpu.concatenate %25, %26 in 1 : vector<8x4x32xbf16>, vector<8x4x32xbf16> -> vector<8x8x32xbf16>
    %28 = vector.shape_cast %27 : vector<8x8x32xbf16> to vector<64x32xbf16>
    %c128 = arith.constant 128 : index
    %c0_10 = arith.constant 0 : index
    %29 = vector.load %arg2[%c128, %c0_10] : memref<160x384xbf16, #tpu.memory_space<vmem>>, vector<32x384xbf16>
    %cst_11 = arith.constant dense<0.000000e+00> : vector<64x384xf32>
    %30 = tpu.matmul %28, %29, %cst_11 {dimension_numbers = #tpu.dot_dimension_numbers<[1], [0], [0], [1], [0, 0, 1, 1], [], []>} : vector<64x32xbf16>, vector<32x384xbf16>, vector<64x384xf32> -> vector<64x384xf32>
    %31 = arith.addf %24, %30 : vector<64x384xf32>
    %32 = vector.shape_cast %31 : vector<64x384xf32> to vector<8x8x384xf32>
    %c0_12 = arith.constant 0 : index
    %c0_13 = arith.constant 0 : index
    %33 = vector.load %arg3[%c0_12, %c0_13] : memref<8x384xf32, #tpu.memory_space<vmem>>, vector<8x384xf32>
    %34 = vector.shape_cast %33 : vector<8x384xf32> to vector<1x8x384xf32>
    %35 = vector.broadcast %34 : vector<1x8x384xf32> to vector<8x8x384xf32>
    %36 = arith.addf %32, %35 : vector<8x8x384xf32>
    %cst_14 = arith.constant 0.000000e+00 : f32
    %37 = vector.broadcast %cst_14 : f32 to vector<8x8x384xf32>
    %38 = arith.maximumf %36, %37 : vector<8x8x384xf32>
    %cst_15 = arith.constant dense<0xFF800000> : vector<8x384xf32>
    %39 = vector.multi_reduction <maximumf>, %38, %cst_15 [1] : vector<8x8x384xf32> to vector<8x384xf32>
    %40 = arith.truncf %39 : vector<8x384xf32> to vector<8x384xbf16>
    %c0_16 = arith.constant 0 : index
    %c0_17 = arith.constant 0 : index
    %41 = vector.load %arg4[%c0_16, %c0_17] : memref<384x128xbf16, #tpu.memory_space<vmem>>, vector<384x128xbf16>
    %cst_18 = arith.constant dense<0.000000e+00> : vector<8x128xf32>
    %42 = tpu.matmul %40, %41, %cst_18 {dimension_numbers = #tpu.dot_dimension_numbers<[1], [0], [0], [1], [0, 0, 1, 1], [], []>} : vector<8x384xbf16>, vector<384x128xbf16>, vector<8x128xf32> -> vector<8x128xf32>
    %c0_19 = arith.constant 0 : index
    %c0_20 = arith.constant 0 : index
    %43 = vector.load %arg5[%c0_19, %c0_20] : memref<1x128xf32, #tpu.memory_space<vmem>>, vector<1x128xf32>
    %44 = vector.broadcast %43 : vector<1x128xf32> to vector<8x128xf32>
    %45 = arith.addf %42, %44 : vector<8x128xf32>
    %c0_21 = arith.constant 0 : index
    %c0_22 = arith.constant 0 : index
    %46 = vector.load %arg6[%c0_21, %c0_22] : memref<8x128xf32, #tpu.memory_space<vmem>>, vector<8x128xf32>
    tpu.vector_store %arg6[%c0_21, %c0_22], %45 {strides = array<i32>} : memref<8x128xf32, #tpu.memory_space<vmem>>, vector<8x128xf32>,
    %47 = arith.mulf %39, %39 : vector<8x384xf32>
    %cst_23 = arith.constant dense<0.000000e+00> : vector<8xf32>
    %48 = vector.multi_reduction <add>, %47, %cst_23 [1] : vector<8x384xf32> to vector<8xf32>
    %49 = vector.shape_cast %48 : vector<8xf32> to vector<8x1xf32>
    %cst_24 = arith.constant 1.000000e-24 : f32
    %50 = vector.broadcast %cst_24 : f32 to vector<8x1xf32>
    %51 = arith.maximumf %49, %50 : vector<8x1xf32>
    %52 = math.rsqrt %51 : vector<8x1xf32>
    %53 = vector.broadcast %52 : vector<8x1xf32> to vector<8x384xf32>
    %54 = arith.mulf %39, %53 : vector<8x384xf32>
    %c0_25 = arith.constant 0 : index
    %c0_26 = arith.constant 0 : index
    %55 = vector.load %arg7[%c0_25, %c0_26] : memref<8x384xf32, #tpu.memory_space<vmem>>, vector<8x384xf32>
    tpu.vector_store %arg7[%c0_25, %c0_26], %54 {strides = array<i32>} : memref<8x384xf32, #tpu.memory_space<vmem>>, vector<8x384xf32>,
    return
  }
  func.func @transform_0(%arg0: i32) -> (i32, i32, i32) {
    %c0_i32 = arith.constant 0 : i32
    %c0_i32_0 = arith.constant 0 : i32
    %c0_i32_1 = arith.constant 0 : i32
    return %arg0, %c0_i32, %c0_i32_0 : i32, i32, i32
  }
  func.func @transform_1(%arg0: i32) -> (i32, i32) {
    %c0_i32 = arith.constant 0 : i32
    %c0_i32_0 = arith.constant 0 : i32
    %c0_i32_1 = arith.constant 0 : i32
    return %c0_i32, %c0_i32_0 : i32, i32
  }
  func.func @transform_2(%arg0: i32) -> (i32, i32) {
    %c0_i32 = arith.constant 0 : i32
    %c0_i32_0 = arith.constant 0 : i32
    %c0_i32_1 = arith.constant 0 : i32
    return %c0_i32, %c0_i32_0 : i32, i32
  }
  func.func @transform_3(%arg0: i32) -> (i32, i32) {
    %c0_i32 = arith.constant 0 : i32
    %c0_i32_0 = arith.constant 0 : i32
    %c0_i32_1 = arith.constant 0 : i32
    return %c0_i32, %c0_i32_0 : i32, i32
  }
  func.func @transform_4(%arg0: i32) -> (i32, i32) {
    %c0_i32 = arith.constant 0 : i32
    %c0_i32_0 = arith.constant 0 : i32
    %c0_i32_1 = arith.constant 0 : i32
    return %c0_i32, %c0_i32_0 : i32, i32
  }
  func.func @transform_5(%arg0: i32) -> (i32, i32) {
    %c0_i32 = arith.constant 0 : i32
    %c0_i32_0 = arith.constant 0 : i32
    return %arg0, %c0_i32 : i32, i32
  }
  func.func @transform_6(%arg0: i32) -> (i32, i32) {
    %c0_i32 = arith.constant 0 : i32
    %c0_i32_0 = arith.constant 0 : i32
    return %arg0, %c0_i32 : i32, i32
  }
}

</mosaic_0001>

<llo_original>
// kernel: tpu_custom_call.1
$region0: #{tpu_custom_call.1}
  #allocation0 [shape = 'u32[]', space=smem, size = 0x4, offset = 0x4, fixed_abs, tag = 'smem constant byte address 0x4 - core index']
  #allocation1 [shape = 'u32[72,128]{1,0:T(1,128)}', space=vmem, size = 0x9000, scoped, tag = 'internal scratch']
  %s0 = inlined_call_operand.hbm [shape: bf16[8,8,32], index: 0, kind: input, shape index: {}]
  %s1 = inlined_call_operand.hbm [shape: bf16[160,384], index: 1, kind: input, shape index: {}]
  %s2 = inlined_call_operand.hbm [shape: f32[8,384], index: 2, kind: input, shape index: {}]
  %s3 = inlined_call_operand.hbm [shape: bf16[384,128], index: 3, kind: input, shape index: {}]
  %s4 = inlined_call_operand.vmem [shape: f32[1,128], index: 4, kind: input, shape index: {}]
  %s5 = inlined_call_operand.hbm [shape: f32[8,128], index: 5, kind: output, shape index: {0}]
  %s6 = inlined_call_operand.hbm [shape: f32[8,384], index: 6, kind: output, shape index: {1}]
  %7 = xla_tuple %s5, %s6
  %s8 = sld [smem:[#allocation0]]
  $region54: #{tpu_custom_call.1} parent=0
    _
  %s10 = ssub.s32 1, %s8
  %s11 = scalar_select 0, %s10, %s8
  $region1: #{tpu_custom_call.1} parent=0
    #allocation2 [shape = 'u8[16384]{0}', space=vmem, size = 0x4000, scoped, tag = 'input window, operand 0, single buffered']
    #allocation3 [shape = 's32[1]{0}', space=sflag, size = 0x4, scoped, tag = 'scoped memory for tpu_custom_call.1']
    #allocation4 [shape = 's32[1]{0}', space=sflag, size = 0x4, scoped, tag = 'scoped memory for tpu_custom_call.1']
    #allocation5 [shape = 'u8[122880]{0}', space=vmem, size = 0x1e000, scoped, tag = 'input window, operand 1, single buffered']
    #allocation6 [shape = 's32[1]{0}', space=sflag, size = 0x4, scoped, tag = 'scoped memory for tpu_custom_call.1']
    #allocation7 [shape = 'u8[12288]{0}', space=vmem, size = 0x3000, scoped, tag = 'input window, operand 2, single buffered']
    #allocation8 [shape = 'u8[98304]{0}', space=vmem, size = 0x18000, scoped, tag = 'input window, operand 3, single buffered']
    #allocation9 [shape = 's32[1]{0}', space=sflag, size = 0x4, scoped, tag = 'scoped memory for tpu_custom_call.1']
    #allocation10 [shape = 'u8[4096]{0}', space=vmem, size = 0x1000, scoped, tag = 'output window, operand 0, single buffered']
    #allocation11 [shape = 'u8[12288]{0}', space=vmem, size = 0x3000, scoped, tag = 'output window, operand 1, single buffered']
    #allocation12 [shape = 's32[1]{0}', space=sflag, size = 0x4, scoped, tag = 'scoped memory for tpu_custom_call.1']
    %12 = vsyncpa [#allocation3], 0
    %13 = vsyncpa [#allocation6], 0
    %14 = vsyncpa [#allocation9], 0
    %15 = vsyncpa [#allocation4], 0
    %16 = vsyncpa [#allocation12], 0
    // Predicated region
    $region2: #{tpu_custom_call.1} parent=1 // pred_check
      _
    $region3: #{tpu_custom_call.1} parent=1 // pred_check_branch
      %18 = sbr.rel (0) target = $region5
    $region4: #{tpu_custom_call.1} parent=1 // pred_region
      %20 = vsyncadd [#allocation3], 0
      %s21 = sshll.u32 %s0, 4
      %s22 = int_to_ptr.hbm [resolvable:$true] %s21
      %s23 = sshll.u32 [#allocation2], 4
      %s24 = int_to_ptr.vmem [resolvable:$true] %s23
      %29 = dma.hbm_to_vmem [thread:$0]  %s22, 512, %s24, [#allocation3], 64, 64, 4
    $region5: #{tpu_custom_call.1} parent=1 // pred_fallthru
      _
    // Predicated region
    $region6: #{tpu_custom_call.1} parent=1 // pred_check
      _
    $region7: #{tpu_custom_call.1} parent=1 // pred_check_branch
      %31 = sbr.rel (0) target = $region9
    $region8: #{tpu_custom_call.1} parent=1 // pred_region
      %33 = vsyncadd [#allocation6], 0
      %s34 = sshll.u32 %s1, 4
      %s35 = int_to_ptr.hbm [resolvable:$true] %s34
      %s36 = sshll.u32 [#allocation5], 4
      %s37 = int_to_ptr.vmem [resolvable:$true] %s36
      %42 = dma.hbm_to_vmem [thread:$0]  %s35, 3840, %s37, [#allocation6], 192, 192, 12
    $region9: #{tpu_custom_call.1} parent=1 // pred_fallthru
      _
    // Predicated region
    $region10: #{tpu_custom_call.1} parent=1 // pred_check
      _
    $region11: #{tpu_custom_call.1} parent=1 // pred_check_branch
      %44 = sbr.rel (0) target = $region13
    $region12: #{tpu_custom_call.1} parent=1 // pred_region
      %46 = vsyncadd [#allocation6], 0
      %s48 = sshll.u32 %s2, 4
      %s49 = int_to_ptr.hbm [resolvable:$true] %s48
      %s50 = sshll.u32 [#allocation7], 4
      %s51 = int_to_ptr.vmem [resolvable:$true] %s50
      %53 = dma.hbm_to_vmem [thread:$0]  %s49, 384, %s51, [#allocation6]
    $region13: #{tpu_custom_call.1} parent=1 // pred_fallthru
      _
    // Predicated region
    $region14: #{tpu_custom_call.1} parent=1 // pred_check
      _
    $region15: #{tpu_custom_call.1} parent=1 // pred_check_branch
      %55 = sbr.rel (0) target = $region17
    $region16: #{tpu_custom_call.1} parent=1 // pred_region
      %57 = vsyncadd [#allocation9], 0
      %s58 = sshll.u32 %s3, 4
      %s59 = int_to_ptr.hbm [resolvable:$true] %s58
      %s60 = sshll.u32 [#allocation8], 4
      %s61 = int_to_ptr.vmem [resolvable:$true] %s60
      %66 = dma.hbm_to_vmem [thread:$0]  %s59, 3072, %s61, [#allocation9], 64, 64, 4
    $region17: #{tpu_custom_call.1} parent=1 // pred_fallthru
      _
    // Predicated region
    $region18: #{tpu_custom_call.1} parent=1 // pred_check
      _
    $region19: #{tpu_custom_call.1} parent=1 // pred_check_branch
      %68 = sbr.rel (0) target = $region21
    $region20: #{tpu_custom_call.1} parent=1 // pred_region
      _
    $region21: #{tpu_custom_call.1} parent=1 // pred_fallthru
      _
    // Predicated region
    $region22: #{tpu_custom_call.1} parent=1 // pred_check
      _
    $region23: #{tpu_custom_call.1} parent=1 // pred_check_branch
      %70 = sbr.rel (0) target = $region25
    $region24: #{tpu_custom_call.1} parent=1 // pred_region
      %72 = dma.done [#allocation3], 512
    $region25: #{tpu_custom_call.1} parent=1 // pred_fallthru
      _
    // Predicated region
    $region26: #{tpu_custom_call.1} parent=1 // pred_check
      _
    $region27: #{tpu_custom_call.1} parent=1 // pred_check_branch
      %74 = sbr.rel (0) target = $region29
    $region28: #{tpu_custom_call.1} parent=1 // pred_region
      %76 = dma.done [#allocation6], 3840
    $region29: #{tpu_custom_call.1} parent=1 // pred_fallthru
      _
    // Predicated region
    $region30: #{tpu_custom_call.1} parent=1 // pred_check
      _
    $region31: #{tpu_custom_call.1} parent=1 // pred_check_branch
      %78 = sbr.rel (0) target = $region33
    $region32: #{tpu_custom_call.1} parent=1 // pred_region
      %80 = dma.done [#allocation6], 384
    $region33: #{tpu_custom_call.1} parent=1 // pred_fallthru
      _
    // Predicated region
    $region34: #{tpu_custom_call.1} parent=1 // pred_check
      _
    $region35: #{tpu_custom_call.1} parent=1 // pred_check_branch
      %82 = sbr.rel (0) target = $region37
    $region36: #{tpu_custom_call.1} parent=1 // pred_region
      %84 = dma.done [#allocation9], 3072
    $region37: #{tpu_custom_call.1} parent=1 // pred_fallthru
      _
    %v86 = vld [vmem:[#allocation2] sm:$0xf]
    %v87 = vld [vmem:[#allocation2 + $0x4] sm:$0xf]
    %v88 = vld [vmem:[#allocation2 + $0x8] sm:$0xf]
    %v89 = vld [vmem:[#allocation2 + $0xc] sm:$0xf]
    %v90 = vld [vmem:[#allocation2 + $0x10] sm:$0xf]
    %v91 = vld [vmem:[#allocation2 + $0x14] sm:$0xf]
    %v92 = vld [vmem:[#allocation2 + $0x18] sm:$0xf]
    %v93 = vld [vmem:[#allocation2 + $0x1c] sm:$0xf]
    %v94 = vld [vmem:[#allocation5] sm:$0xff]
    %v95 = vld [vmem:[#allocation5 + $0x8] sm:$0xf]
    %v96 = vld [vmem:[#allocation5 + $0xc] sm:$0xff]
    %v97 = vld [vmem:[#allocation5 + $0x14] sm:$0xf]
    %v98 = vld [vmem:[#allocation5 + $0x18] sm:$0xff]
    %v99 = vld [vmem:[#allocation5 + $0x20] sm:$0xf]
    %v100 = vld [vmem:[#allocation5 + $0x24] sm:$0xff]
    %v101 = vld [vmem:[#allocation5 + $0x2c] sm:$0xf]
    %v110 = vunpack.c.l.b16 %v86
    %v111 = vunpack.c.l.b16 %v87
    %v112 = vunpack.c.l.b16 %v88
    %v113 = vunpack.c.l.b16 %v89
    %v114 = vunpack.c.l.b16 %v90
    %v115 = vunpack.c.l.b16 %v91
    %v116 = vunpack.c.l.b16 %v92
    %v117 = vunpack.c.l.b16 %v93
    %v118 = vpack.c.b16 %v110, %v110
    %v119 = vpack.c.b16 %v111, %v111
    %v120 = vpack.c.b16 %v112, %v112
    %v121 = vpack.c.b16 %v113, %v113
    %v122 = vpack.c.b16 %v114, %v114
    %v123 = vpack.c.b16 %v115, %v115
    %v124 = vpack.c.b16 %v116, %v116
    %v125 = vpack.c.b16 %v117, %v117
    %v127 = vshrl.u32 %v118, 16
    %v129 = vshll.u32 %v118, 16
    %v131 = vrot.slane %v129, 1
    %v132 = vor.u32 %v127, %v131
    %v134 = vshrl.u32 %v119, 16
    %v136 = vshll.u32 %v119, 16
    %v138 = vrot.slane %v136, 1
    %v139 = vor.u32 %v134, %v138
    %v141 = vshrl.u32 %v120, 16
    %v143 = vshll.u32 %v120, 16
    %v145 = vrot.slane %v143, 1
    %v146 = vor.u32 %v141, %v145
    %v148 = vshrl.u32 %v121, 16
    %v150 = vshll.u32 %v121, 16
    %v152 = vrot.slane %v150, 1
    %v153 = vor.u32 %v148, %v152
    %v155 = vshrl.u32 %v122, 16
    %v157 = vshll.u32 %v122, 16
    %v159 = vrot.slane %v157, 1
    %v160 = vor.u32 %v155, %v159
    %v162 = vshrl.u32 %v123, 16
    %v164 = vshll.u32 %v123, 16
    %v166 = vrot.slane %v164, 1
    %v167 = vor.u32 %v162, %v166
    %v169 = vshrl.u32 %v124, 16
    %v171 = vshll.u32 %v124, 16
    %v173 = vrot.slane %v171, 1
    %v174 = vor.u32 %v169, %v173
    %v176 = vshrl.u32 %v125, 16
    %v178 = vshll.u32 %v125, 16
    %v180 = vrot.slane %v178, 1
    %v181 = vor.u32 %v176, %v180
    %v190 = vrot.slane %v129, 5
    %v191 = vrot.slane %v136, 5
    %v192 = vrot.slane %v143, 5
    %v193 = vrot.slane %v150, 5
    %v194 = vrot.slane %v157, 5
    %v195 = vrot.slane %v164, 5
    %v196 = vrot.slane %v171, 5
    %v197 = vrot.slane %v178, 5
    %vm206 = vcmask 1043456
    %vm207 = vsmask.f32 3328
    %vm208 = vmand %vm206, %vm207
    %v209 = vsel %vm208, %v132, %v190
    %v210 = vsel %vm208, %v139, %v191
    %v211 = vsel %vm208, %v146, %v192
    %v212 = vsel %vm208, %v153, %v193
    %v213 = vsel %vm208, %v160, %v194
    %v214 = vsel %vm208, %v167, %v195
    %v215 = vsel %vm208, %v174, %v196
    %v216 = vsel %vm208, %v181, %v197
    %v217 = vld [vmem:[#allocation5 + $0x30] sm:$0xff]
    %v218 = vld [vmem:[#allocation5 + $0x38] sm:$0xf]
    %v219 = vld [vmem:[#allocation5 + $0x3c] sm:$0xff]
    %v220 = vld [vmem:[#allocation5 + $0x44] sm:$0xf]
    %v221 = vld [vmem:[#allocation5 + $0x48] sm:$0xff]
    %v222 = vld [vmem:[#allocation5 + $0x50] sm:$0xf]
    %v223 = vld [vmem:[#allocation5 + $0x54] sm:$0xff]
    %v224 = vld [vmem:[#allocation5 + $0x5c] sm:$0xf]
    %v233 = vunpack.c.l.b16 %v209
    %v234 = vunpack.c.l.b16 %v210
    %v235 = vunpack.c.l.b16 %v211
    %v236 = vunpack.c.l.b16 %v212
    %v237 = vunpack.c.l.b16 %v213
    %v238 = vunpack.c.l.b16 %v214
    %v239 = vunpack.c.l.b16 %v215
    %v240 = vunpack.c.l.b16 %v216
    %v241 = vpack.c.b16 %v234, %v233
    %v242 = vpack.c.b16 %v236, %v235
    %v243 = vpack.c.b16 %v238, %v237
    %v244 = vpack.c.b16 %v240, %v239
    %v253 = vunpack.c.l.b16 %v217
    %v254 = vunpack.c.h.b16 %v217
    %v255 = vunpack.c.l.b16 %v218
    %v256 = vunpack.c.l.b16 %v219
    %v257 = vunpack.c.h.b16 %v219
    %v258 = vunpack.c.l.b16 %v220
    %v259 = vunpack.c.l.b16 %v221
    %v260 = vunpack.c.h.b16 %v221
    %v261 = vunpack.c.l.b16 %v222
    %v262 = vunpack.c.l.b16 %v223
    %v263 = vunpack.c.h.b16 %v223
    %v264 = vunpack.c.l.b16 %v224
    %v265 = vpack.c.b16 %v256, %v253
    %v266 = vpack.c.b16 %v257, %v254
    %v267 = vpack.c.b16 %v258, %v255
    %v268 = vpack.c.b16 %v262, %v259
    %v269 = vpack.c.b16 %v263, %v260
    %v270 = vpack.c.b16 %v264, %v261
    %vm277 = vcmask 261120
    %v279 = vsel %vm277, %v241, 0
    %v282 = vsel %vm277, %v242, 0
    %v285 = vsel %vm277, %v243, 0
    %v288 = vsel %vm277, %v244, 0
    %290 = vmatpush.bf16.msra.mxu0 0
    %291 = vmatpush.bf16.msra.mxu0 0
    %292 = vmatpush.bf16.msra.mxu0 0
    %293 = vmatpush.bf16.msra.mxu0 0
    %294 = vmatpush.bf16.msra.mxu0 0
    %295 = vmatpush.bf16.msra.mxu0 0
    %296 = vmatpush.bf16.msra.mxu0 %v268
    %297 = vmatpush.bf16.msra.mxu0 %v265
    %298 = vmatmul.bf16.gmra.mxu0 %v279
    %v299 = vpop.f32.mrf.mxu0
    %v300 = vadd.f32 0.0, %v299
    %v301 = vpop.f32.mrf.mxu0
    %v302 = vadd.f32 0.0, %v301
    %303 = vmatmul.bf16.gmra.mxu0 %v282
    %v304 = vpop.f32.mrf.mxu0
    %v305 = vadd.f32 0.0, %v304
    %v306 = vpop.f32.mrf.mxu0
    %v307 = vadd.f32 0.0, %v306
    %308 = vmatmul.bf16.gmra.mxu0 %v285
    %v309 = vpop.f32.mrf.mxu0
    %v310 = vadd.f32 0.0, %v309
    %v311 = vpop.f32.mrf.mxu0
    %v312 = vadd.f32 0.0, %v311
    %313 = vmatmul.bf16.gmra.mxu0 %v288
    %v314 = vpop.f32.mrf.mxu0
    %v315 = vadd.f32 0.0, %v314
    %v316 = vpop.f32.mrf.mxu0
    %v317 = vadd.f32 0.0, %v316
    %318 = vdwg.mxu0
    %319 = vmatpush.bf16.msra.mxu0 0
    %320 = vmatpush.bf16.msra.mxu0 0
    %321 = vmatpush.bf16.msra.mxu0 0
    %322 = vmatpush.bf16.msra.mxu0 0
    %323 = vmatpush.bf16.msra.mxu0 0
    %324 = vmatpush.bf16.msra.mxu0 0
    %325 = vmatpush.bf16.msra.mxu0 %v269
    %326 = vmatpush.bf16.msra.mxu0 %v266
    %327 = vmatmul.bf16.gmra.mxu0 %v279
    %v328 = vpop.f32.mrf.mxu0
    %v329 = vadd.f32 0.0, %v328
    %v330 = vpop.f32.mrf.mxu0
    %v331 = vadd.f32 0.0, %v330
    %332 = vmatmul.bf16.gmra.mxu0 %v282
    %v333 = vpop.f32.mrf.mxu0
    %v334 = vadd.f32 0.0, %v333
    %v335 = vpop.f32.mrf.mxu0
    %v336 = vadd.f32 0.0, %v335
    %337 = vmatmul.bf16.gmra.mxu0 %v285
    %v338 = vpop.f32.mrf.mxu0
    %v339 = vadd.f32 0.0, %v338
    %v340 = vpop.f32.mrf.mxu0
    %v341 = vadd.f32 0.0, %v340
    %342 = vmatmul.bf16.gmra.mxu0 %v288
    %v343 = vpop.f32.mrf.mxu0
    %v344 = vadd.f32 0.0, %v343
    %v345 = vpop.f32.mrf.mxu0
    %v346 = vadd.f32 0.0, %v345
    %347 = vdwg.mxu0
    %348 = vmatpush.bf16.msra.mxu0 0
    %349 = vmatpush.bf16.msra.mxu0 0
    %350 = vmatpush.bf16.msra.mxu0 0
    %351 = vmatpush.bf16.msra.mxu0 0
    %352 = vmatpush.bf16.msra.mxu0 0
    %353 = vmatpush.bf16.msra.mxu0 0
    %354 = vmatpush.bf16.msra.mxu0 %v270
    %355 = vmatpush.bf16.msra.mxu0 %v267
    %356 = vmatmul.bf16.gmra.mxu0 %v279
    %v357 = vpop.f32.mrf.mxu0
    %v358 = vadd.f32 0.0, %v357
    %v359 = vpop.f32.mrf.mxu0
    %v360 = vadd.f32 0.0, %v359
    %361 = vmatmul.bf16.gmra.mxu0 %v282
    %v362 = vpop.f32.mrf.mxu0
    %v363 = vadd.f32 0.0, %v362
    %v364 = vpop.f32.mrf.mxu0
    %v365 = vadd.f32 0.0, %v364
    %366 = vmatmul.bf16.gmra.mxu0 %v285
    %v367 = vpop.f32.mrf.mxu0
    %v368 = vadd.f32 0.0, %v367
    %v369 = vpop.f32.mrf.mxu0
    %v370 = vadd.f32 0.0, %v369
    %371 = vmatmul.bf16.gmra.mxu0 %v288
    %v372 = vpop.f32.mrf.mxu0
    %v373 = vadd.f32 0.0, %v372
    %v374 = vpop.f32.mrf.mxu0
    %v375 = vadd.f32 0.0, %v374
    %376 = vdwg.mxu0
    %v377 = vpack.c.b16 %v111, %v110
    %v378 = vpack.c.b16 %v113, %v112
    %v379 = vpack.c.b16 %v115, %v114
    %v380 = vpack.c.b16 %v117, %v116
    %v389 = vunpack.c.l.b16 %v94
    %v390 = vunpack.c.h.b16 %v94
    %v391 = vunpack.c.l.b16 %v95
    %v392 = vunpack.c.l.b16 %v96
    %v393 = vunpack.c.h.b16 %v96
    %v394 = vunpack.c.l.b16 %v97
    %v395 = vunpack.c.l.b16 %v98
    %v396 = vunpack.c.h.b16 %v98
    %v397 = vunpack.c.l.b16 %v99
    %v398 = vunpack.c.l.b16 %v100
    %v399 = vunpack.c.h.b16 %v100
    %v400 = vunpack.c.l.b16 %v101
    %v401 = vpack.c.b16 %v392, %v389
    %v402 = vpack.c.b16 %v393, %v390
    %v403 = vpack.c.b16 %v394, %v391
    %v404 = vpack.c.b16 %v398, %v395
    %v405 = vpack.c.b16 %v399, %v396
    %v406 = vpack.c.b16 %v400, %v397
    %v414 = vsel %vm277, %v377, 0
    %v417 = vsel %vm277, %v378, 0
    %v420 = vsel %vm277, %v379, 0
    %v423 = vsel %vm277, %v380, 0
    %425 = vmatpush.bf16.msra.mxu0 0
    %426 = vmatpush.bf16.msra.mxu0 0
    %427 = vmatpush.bf16.msra.mxu0 0
    %428 = vmatpush.bf16.msra.mxu0 0
    %429 = vmatpush.bf16.msra.mxu0 0
    %430 = vmatpush.bf16.msra.mxu0 0
    %431 = vmatpush.bf16.msra.mxu0 %v404
    %432 = vmatpush.bf16.msra.mxu0 %v401
    %433 = vmatmul.bf16.gmra.mxu0 %v414
    %v434 = vpop.f32.mrf.mxu0
    %v435 = vadd.f32 %v300, %v434
    %v436 = vpop.f32.mrf.mxu0
    %v437 = vadd.f32 %v302, %v436
    %438 = vmatmul.bf16.gmra.mxu0 %v417
    %v439 = vpop.f32.mrf.mxu0
    %v440 = vadd.f32 %v305, %v439
    %v441 = vpop.f32.mrf.mxu0
    %v442 = vadd.f32 %v307, %v441
    %443 = vmatmul.bf16.gmra.mxu0 %v420
    %v444 = vpop.f32.mrf.mxu0
    %v445 = vadd.f32 %v310, %v444
    %v446 = vpop.f32.mrf.mxu0
    %v447 = vadd.f32 %v312, %v446
    %448 = vmatmul.bf16.gmra.mxu0 %v423
    %v449 = vpop.f32.mrf.mxu0
    %v450 = vadd.f32 %v315, %v449
    %v451 = vpop.f32.mrf.mxu0
    %v452 = vadd.f32 %v317, %v451
    %453 = vdwg.mxu0
    %454 = vmatpush.bf16.msra.mxu0 0
    %455 = vmatpush.bf16.msra.mxu0 0
    %456 = vmatpush.bf16.msra.mxu0 0
    %457 = vmatpush.bf16.msra.mxu0 0
    %458 = vmatpush.bf16.msra.mxu0 0
    %459 = vmatpush.bf16.msra.mxu0 0
    %460 = vmatpush.bf16.msra.mxu0 %v405
    %461 = vmatpush.bf16.msra.mxu0 %v402
    %462 = vmatmul.bf16.gmra.mxu0 %v414
    %v463 = vpop.f32.mrf.mxu0
    %v464 = vadd.f32 %v329, %v463
    %v465 = vpop.f32.mrf.mxu0
    %v466 = vadd.f32 %v331, %v465
    %467 = vmatmul.bf16.gmra.mxu0 %v417
    %v468 = vpop.f32.mrf.mxu0
    %v469 = vadd.f32 %v334, %v468
    %v470 = vpop.f32.mrf.mxu0
    %v471 = vadd.f32 %v336, %v470
    %472 = vmatmul.bf16.gmra.mxu0 %v420
    %v473 = vpop.f32.mrf.mxu0
    %v474 = vadd.f32 %v339, %v473
    %v475 = vpop.f32.mrf.mxu0
    %v476 = vadd.f32 %v341, %v475
    %477 = vmatmul.bf16.gmra.mxu0 %v423
    %v478 = vpop.f32.mrf.mxu0
    %v479 = vadd.f32 %v344, %v478
    %v480 = vpop.f32.mrf.mxu0
    %v481 = vadd.f32 %v346, %v480
    %482 = vdwg.mxu0
    %483 = vmatpush.bf16.msra.mxu0 0
    %484 = vmatpush.bf16.msra.mxu0 0
    %485 = vmatpush.bf16.msra.mxu0 0
    %486 = vmatpush.bf16.msra.mxu0 0
    %487 = vmatpush.bf16.msra.mxu0 0
    %488 = vmatpush.bf16.msra.mxu0 0
    %489 = vmatpush.bf16.msra.mxu0 %v406
    %490 = vmatpush.bf16.msra.mxu0 %v403
    %491 = vmatmul.bf16.gmra.mxu0 %v414
    %v492 = vpop.f32.mrf.mxu0
    %v493 = vadd.f32 %v358, %v492
    %v494 = vpop.f32.mrf.mxu0
    %v495 = vadd.f32 %v360, %v494
    %496 = vmatmul.bf16.gmra.mxu0 %v417
    %v497 = vpop.f32.mrf.mxu0
    %v498 = vadd.f32 %v363, %v497
    %v499 = vpop.f32.mrf.mxu0
    %v500 = vadd.f32 %v365, %v499
    %501 = vmatmul.bf16.gmra.mxu0 %v420
    %v502 = vpop.f32.mrf.mxu0
    %v503 = vadd.f32 %v368, %v502
    %v504 = vpop.f32.mrf.mxu0
    %v505 = vadd.f32 %v370, %v504
    %506 = vmatmul.bf16.gmra.mxu0 %v423
    %v507 = vpop.f32.mrf.mxu0
    %v508 = vadd.f32 %v373, %v507
    %v509 = vpop.f32.mrf.mxu0
    %v510 = vadd.f32 %v375, %v509
    %511 = vdwg.mxu0
    %v512 = vrot.slane %v118, 1
    %v513 = vrot.slane %v119, 1
    %v514 = vrot.slane %v120, 1
    %v515 = vrot.slane %v121, 1
    %v516 = vrot.slane %v122, 1
    %v517 = vrot.slane %v123, 1
    %v518 = vrot.slane %v124, 1
    %v519 = vrot.slane %v125, 1
    %v520 = vrot.slane %v118, 5
    %v521 = vrot.slane %v119, 5
    %v522 = vrot.slane %v120, 5
    %v523 = vrot.slane %v121, 5
    %v524 = vrot.slane %v122, 5
    %v525 = vrot.slane %v123, 5
    %v526 = vrot.slane %v124, 5
    %v527 = vrot.slane %v125, 5
    %vm528 = vcmask 1042432
    %v531 = vsel %vm528, %v512, %v520
    %v534 = vsel %vm528, %v513, %v521
    %v537 = vsel %vm528, %v514, %v522
    %v540 = vsel %vm528, %v515, %v523
    %v543 = vsel %vm528, %v516, %v524
    %v546 = vsel %vm528, %v517, %v525
    %v549 = vsel %vm528, %v518, %v526
    %v552 = vsel %vm528, %v519, %v527
    %v553 = vld [vmem:[#allocation5 + $0x60] sm:$0xff]
    %v554 = vld [vmem:[#allocation5 + $0x68] sm:$0xf]
    %v555 = vld [vmem:[#allocation5 + $0x6c] sm:$0xff]
    %v556 = vld [vmem:[#allocation5 + $0x74] sm:$0xf]
    %v557 = vld [vmem:[#allocation5 + $0x78] sm:$0xff]
    %v558 = vld [vmem:[#allocation5 + $0x80] sm:$0xf]
    %v559 = vld [vmem:[#allocation5 + $0x84] sm:$0xff]
    %v560 = vld [vmem:[#allocation5 + $0x8c] sm:$0xf]
    %v569 = vunpack.c.l.b16 %v531
    %v570 = vunpack.c.l.b16 %v534
    %v571 = vunpack.c.l.b16 %v537
    %v572 = vunpack.c.l.b16 %v540
    %v573 = vunpack.c.l.b16 %v543
    %v574 = vunpack.c.l.b16 %v546
    %v575 = vunpack.c.l.b16 %v549
    %v576 = vunpack.c.l.b16 %v552
    %v577 = vpack.c.b16 %v570, %v569
    %v578 = vpack.c.b16 %v572, %v571
    %v579 = vpack.c.b16 %v574, %v573
    %v580 = vpack.c.b16 %v576, %v575
    %v589 = vunpack.c.l.b16 %v553
    %v590 = vunpack.c.h.b16 %v553
    %v591 = vunpack.c.l.b16 %v554
    %v592 = vunpack.c.l.b16 %v555
    %v593 = vunpack.c.h.b16 %v555
    %v594 = vunpack.c.l.b16 %v556
    %v595 = vunpack.c.l.b16 %v557
    %v596 = vunpack.c.h.b16 %v557
    %v597 = vunpack.c.l.b16 %v558
    %v598 = vunpack.c.l.b16 %v559
    %v599 = vunpack.c.h.b16 %v559
    %v600 = vunpack.c.l.b16 %v560
    %v601 = vpack.c.b16 %v592, %v589
    %v602 = vpack.c.b16 %v593, %v590
    %v603 = vpack.c.b16 %v594, %v591
    %v604 = vpack.c.b16 %v598, %v595
    %v605 = vpack.c.b16 %v599, %v596
    %v606 = vpack.c.b16 %v600, %v597
    %v614 = vsel %vm277, %v577, 0
    %v617 = vsel %vm277, %v578, 0
    %v620 = vsel %vm277, %v579, 0
    %v623 = vsel %vm277, %v580, 0
    %625 = vmatpush.bf16.msra.mxu0 0
    %626 = vmatpush.bf16.msra.mxu0 0
    %627 = vmatpush.bf16.msra.mxu0 0
    %628 = vmatpush.bf16.msra.mxu0 0
    %629 = vmatpush.bf16.msra.mxu0 0
    %630 = vmatpush.bf16.msra.mxu0 0
    %631 = vmatpush.bf16.msra.mxu0 %v604
    %632 = vmatpush.bf16.msra.mxu0 %v601
    %633 = vmatmul.bf16.gmra.mxu0 %v614
    %v634 = vpop.f32.mrf.mxu0
    %v635 = vadd.f32 0.0, %v634
    %v636 = vpop.f32.mrf.mxu0
    %v637 = vadd.f32 0.0, %v636
    %638 = vmatmul.bf16.gmra.mxu0 %v617
    %v639 = vpop.f32.mrf.mxu0
    %v640 = vadd.f32 0.0, %v639
    %v641 = vpop.f32.mrf.mxu0
    %v642 = vadd.f32 0.0, %v641
    %643 = vmatmul.bf16.gmra.mxu0 %v620
    %v644 = vpop.f32.mrf.mxu0
    %v645 = vadd.f32 0.0, %v644
    %v646 = vpop.f32.mrf.mxu0
    %v647 = vadd.f32 0.0, %v646
    %648 = vmatmul.bf16.gmra.mxu0 %v623
    %v649 = vpop.f32.mrf.mxu0
    %v650 = vadd.f32 0.0, %v649
    %v651 = vpop.f32.mrf.mxu0
    %v652 = vadd.f32 0.0, %v651
    %653 = vdwg.mxu0
    %654 = vmatpush.bf16.msra.mxu0 0
    %655 = vmatpush.bf16.msra.mxu0 0
    %656 = vmatpush.bf16.msra.mxu0 0
    %657 = vmatpush.bf16.msra.mxu0 0
    %658 = vmatpush.bf16.msra.mxu0 0
    %659 = vmatpush.bf16.msra.mxu0 0
    %660 = vmatpush.bf16.msra.mxu0 %v605
    %661 = vmatpush.bf16.msra.mxu0 %v602
    %662 = vmatmul.bf16.gmra.mxu0 %v614
    %v663 = vpop.f32.mrf.mxu0
    %v664 = vadd.f32 0.0, %v663
    %v665 = vpop.f32.mrf.mxu0
    %v666 = vadd.f32 0.0, %v665
    %667 = vmatmul.bf16.gmra.mxu0 %v617
    %v668 = vpop.f32.mrf.mxu0
    %v669 = vadd.f32 0.0, %v668
    %v670 = vpop.f32.mrf.mxu0
    %v671 = vadd.f32 0.0, %v670
    %672 = vmatmul.bf16.gmra.mxu0 %v620
    %v673 = vpop.f32.mrf.mxu0
    %v674 = vadd.f32 0.0, %v673
    %v675 = vpop.f32.mrf.mxu0
    %v676 = vadd.f32 0.0, %v675
    %677 = vmatmul.bf16.gmra.mxu0 %v623
    %v678 = vpop.f32.mrf.mxu0
    %v679 = vadd.f32 0.0, %v678
    %v680 = vpop.f32.mrf.mxu0
    %v681 = vadd.f32 0.0, %v680
    %682 = vdwg.mxu0
    %683 = vmatpush.bf16.msra.mxu0 0
    %684 = vmatpush.bf16.msra.mxu0 0
    %685 = vmatpush.bf16.msra.mxu0 0
    %686 = vmatpush.bf16.msra.mxu0 0
    %687 = vmatpush.bf16.msra.mxu0 0
    %688 = vmatpush.bf16.msra.mxu0 0
    %689 = vmatpush.bf16.msra.mxu0 %v606
    %690 = vmatpush.bf16.msra.mxu0 %v603
    %691 = vmatmul.bf16.gmra.mxu0 %v614
    %v692 = vpop.f32.mrf.mxu0
    %v693 = vadd.f32 0.0, %v692
    %v694 = vpop.f32.mrf.mxu0
    %v695 = vadd.f32 0.0, %v694
    %696 = vmatmul.bf16.gmra.mxu0 %v617
    %v697 = vpop.f32.mrf.mxu0
    %v698 = vadd.f32 0.0, %v697
    %v699 = vpop.f32.mrf.mxu0
    %v700 = vadd.f32 0.0, %v699
    %701 = vmatmul.bf16.gmra.mxu0 %v620
    %v702 = vpop.f32.mrf.mxu0
    %v703 = vadd.f32 0.0, %v702
    %v704 = vpop.f32.mrf.mxu0
    %v705 = vadd.f32 0.0, %v704
    %706 = vmatmul.bf16.gmra.mxu0 %v623
    %v707 = vpop.f32.mrf.mxu0
    %v708 = vadd.f32 0.0, %v707
    %v709 = vpop.f32.mrf.mxu0
    %v710 = vadd.f32 0.0, %v709
    %711 = vdwg.mxu0
    %v712 = vadd.f32 %v435, %v635
    %v713 = vadd.f32 %v464, %v664
    %v714 = vadd.f32 %v493, %v693
    %v715 = vadd.f32 %v437, %v637
    %v716 = vadd.f32 %v466, %v666
    %v717 = vadd.f32 %v495, %v695
    %v718 = vadd.f32 %v440, %v640
    %v719 = vadd.f32 %v469, %v669
    %v720 = vadd.f32 %v498, %v698
    %v721 = vadd.f32 %v442, %v642
    %v722 = vadd.f32 %v471, %v671
    %v723 = vadd.f32 %v500, %v700
    %v724 = vadd.f32 %v445, %v645
    %v725 = vadd.f32 %v474, %v674
    %v726 = vadd.f32 %v503, %v703
    %v727 = vadd.f32 %v447, %v647
    %v728 = vadd.f32 %v476, %v676
    %v729 = vadd.f32 %v505, %v705
    %v730 = vadd.f32 %v450, %v650
    %v731 = vadd.f32 %v479, %v679
    %v732 = vadd.f32 %v508, %v708
    %v733 = vadd.f32 %v452, %v652
    %v734 = vadd.f32 %v481, %v681
    %v735 = vadd.f32 %v510, %v710
    %v736 = vrot.slane %v127, 1
    %v737 = vrot.slane %v129, 2
    %v738 = vor.u32 %v736, %v737
    %v739 = vrot.slane %v134, 1
    %v740 = vrot.slane %v136, 2
    %v741 = vor.u32 %v739, %v740
    %v742 = vrot.slane %v141, 1
    %v743 = vrot.slane %v143, 2
    %v744 = vor.u32 %v742, %v743
    %v745 = vrot.slane %v148, 1
    %v746 = vrot.slane %v150, 2
    %v747 = vor.u32 %v745, %v746
    %v748 = vrot.slane %v155, 1
    %v749 = vrot.slane %v157, 2
    %v750 = vor.u32 %v748, %v749
    %v751 = vrot.slane %v162, 1
    %v752 = vrot.slane %v164, 2
    %v753 = vor.u32 %v751, %v752
    %v754 = vrot.slane %v169, 1
    %v755 = vrot.slane %v171, 2
    %v756 = vor.u32 %v754, %v755
    %v757 = vrot.slane %v176, 1
    %v758 = vrot.slane %v178, 2
    %v759 = vor.u32 %v757, %v758
    %v768 = vrot.slane %v127, 5
    %v769 = vrot.slane %v129, 6
    %v770 = vor.u32 %v768, %v769
    %v771 = vrot.slane %v134, 5
    %v772 = vrot.slane %v136, 6
    %v773 = vor.u32 %v771, %v772
    %v774 = vrot.slane %v141, 5
    %v775 = vrot.slane %v143, 6
    %v776 = vor.u32 %v774, %v775
    %v777 = vrot.slane %v148, 5
    %v778 = vrot.slane %v150, 6
    %v779 = vor.u32 %v777, %v778
    %v780 = vrot.slane %v155, 5
    %v781 = vrot.slane %v157, 6
    %v782 = vor.u32 %v780, %v781
    %v783 = vrot.slane %v162, 5
    %v784 = vrot.slane %v164, 6
    %v785 = vor.u32 %v783, %v784
    %v786 = vrot.slane %v169, 5
    %v787 = vrot.slane %v171, 6
    %v788 = vor.u32 %v786, %v787
    %v789 = vrot.slane %v176, 5
    %v790 = vrot.slane %v178, 6
    %v791 = vor.u32 %v789, %v790
    %vm800 = vcmask 1042432
    %vm801 = vsmask.f32 2304
    %vm802 = vmand %vm800, %vm801
    %v803 = vsel %vm802, %v738, %v770
    %v804 = vsel %vm802, %v741, %v773
    %v805 = vsel %vm802, %v744, %v776
    %v806 = vsel %vm802, %v747, %v779
    %v807 = vsel %vm802, %v750, %v782
    %v808 = vsel %vm802, %v753, %v785
    %v809 = vsel %vm802, %v756, %v788
    %v810 = vsel %vm802, %v759, %v791
    %v811 = vld [vmem:[#allocation5 + $0x90] sm:$0xff]
    %v812 = vld [vmem:[#allocation5 + $0x98] sm:$0xf]
    %v813 = vld [vmem:[#allocation5 + $0x9c] sm:$0xff]
    %v814 = vld [vmem:[#allocation5 + $0xa4] sm:$0xf]
    %v815 = vld [vmem:[#allocation5 + $0xa8] sm:$0xff]
    %v816 = vld [vmem:[#allocation5 + $0xb0] sm:$0xf]
    %v817 = vld [vmem:[#allocation5 + $0xb4] sm:$0xff]
    %v818 = vld [vmem:[#allocation5 + $0xbc] sm:$0xf]
    %v827 = vunpack.c.l.b16 %v803
    %v828 = vunpack.c.l.b16 %v804
    %v829 = vunpack.c.l.b16 %v805
    %v830 = vunpack.c.l.b16 %v806
    %v831 = vunpack.c.l.b16 %v807
    %v832 = vunpack.c.l.b16 %v808
    %v833 = vunpack.c.l.b16 %v809
    %v834 = vunpack.c.l.b16 %v810
    %v835 = vpack.c.b16 %v828, %v827
    %v836 = vpack.c.b16 %v830, %v829
    %v837 = vpack.c.b16 %v832, %v831
    %v838 = vpack.c.b16 %v834, %v833
    %v847 = vunpack.c.l.b16 %v811
    %v848 = vunpack.c.h.b16 %v811
    %v849 = vunpack.c.l.b16 %v812
    %v850 = vunpack.c.l.b16 %v813
    %v851 = vunpack.c.h.b16 %v813
    %v852 = vunpack.c.l.b16 %v814
    %v853 = vunpack.c.l.b16 %v815
    %v854 = vunpack.c.h.b16 %v815
    %v855 = vunpack.c.l.b16 %v816
    %v856 = vunpack.c.l.b16 %v817
    %v857 = vunpack.c.h.b16 %v817
    %v858 = vunpack.c.l.b16 %v818
    %v859 = vpack.c.b16 %v850, %v847
    %v860 = vpack.c.b16 %v851, %v848
    %v861 = vpack.c.b16 %v852, %v849
    %v862 = vpack.c.b16 %v856, %v853
    %v863 = vpack.c.b16 %v857, %v854
    %v864 = vpack.c.b16 %v858, %v855
    %v872 = vsel %vm277, %v835, 0
    %v875 = vsel %vm277, %v836, 0
    %v878 = vsel %vm277, %v837, 0
    %v881 = vsel %vm277, %v838, 0
    %883 = vmatpush.bf16.msra.mxu0 0
    %884 = vmatpush.bf16.msra.mxu0 0
    %885 = vmatpush.bf16.msra.mxu0 0
    %886 = vmatpush.bf16.msra.mxu0 0
    %887 = vmatpush.bf16.msra.mxu0 0
    %888 = vmatpush.bf16.msra.mxu0 0
    %889 = vmatpush.bf16.msra.mxu0 %v862
    %890 = vmatpush.bf16.msra.mxu0 %v859
    %891 = vmatmul.bf16.gmra.mxu0 %v872
    %v892 = vpop.f32.mrf.mxu0
    %v893 = vadd.f32 0.0, %v892
    %v894 = vpop.f32.mrf.mxu0
    %v895 = vadd.f32 0.0, %v894
    %896 = vmatmul.bf16.gmra.mxu0 %v875
    %v897 = vpop.f32.mrf.mxu0
    %v898 = vadd.f32 0.0, %v897
    %v899 = vpop.f32.mrf.mxu0
    %v900 = vadd.f32 0.0, %v899
    %901 = vmatmul.bf16.gmra.mxu0 %v878
    %v902 = vpop.f32.mrf.mxu0
    %v903 = vadd.f32 0.0, %v902
    %v904 = vpop.f32.mrf.mxu0
    %v905 = vadd.f32 0.0, %v904
    %906 = vmatmul.bf16.gmra.mxu0 %v881
    %v907 = vpop.f32.mrf.mxu0
    %v908 = vadd.f32 0.0, %v907
    %v909 = vpop.f32.mrf.mxu0
    %v910 = vadd.f32 0.0, %v909
    %911 = vdwg.mxu0
    %912 = vmatpush.bf16.msra.mxu0 0
    %913 = vmatpush.bf16.msra.mxu0 0
    %914 = vmatpush.bf16.msra.mxu0 0
    %915 = vmatpush.bf16.msra.mxu0 0
    %916 = vmatpush.bf16.msra.mxu0 0
    %917 = vmatpush.bf16.msra.mxu0 0
    %918 = vmatpush.bf16.msra.mxu0 %v863
    %919 = vmatpush.bf16.msra.mxu0 %v860
    %920 = vmatmul.bf16.gmra.mxu0 %v872
    %v921 = vpop.f32.mrf.mxu0
    %v922 = vadd.f32 0.0, %v921
    %v923 = vpop.f32.mrf.mxu0
    %v924 = vadd.f32 0.0, %v923
    %925 = vmatmul.bf16.gmra.mxu0 %v875
    %v926 = vpop.f32.mrf.mxu0
    %v927 = vadd.f32 0.0, %v926
    %v928 = vpop.f32.mrf.mxu0
    %v929 = vadd.f32 0.0, %v928
    %930 = vmatmul.bf16.gmra.mxu0 %v878
    %v931 = vpop.f32.mrf.mxu0
    %v932 = vadd.f32 0.0, %v931
    %v933 = vpop.f32.mrf.mxu0
    %v934 = vadd.f32 0.0, %v933
    %935 = vmatmul.bf16.gmra.mxu0 %v881
    %v936 = vpop.f32.mrf.mxu0
    %v937 = vadd.f32 0.0, %v936
    %v938 = vpop.f32.mrf.mxu0
    %v939 = vadd.f32 0.0, %v938
    %940 = vdwg.mxu0
    %941 = vmatpush.bf16.msra.mxu0 0
    %942 = vmatpush.bf16.msra.mxu0 0
    %943 = vmatpush.bf16.msra.mxu0 0
    %944 = vmatpush.bf16.msra.mxu0 0
    %945 = vmatpush.bf16.msra.mxu0 0
    %946 = vmatpush.bf16.msra.mxu0 0
    %947 = vmatpush.bf16.msra.mxu0 %v864
    %948 = vmatpush.bf16.msra.mxu0 %v861
    %949 = vmatmul.bf16.gmra.mxu0 %v872
    %v950 = vpop.f32.mrf.mxu0
    %v951 = vadd.f32 0.0, %v950
    %v952 = vpop.f32.mrf.mxu0
    %v953 = vadd.f32 0.0, %v952
    %954 = vmatmul.bf16.gmra.mxu0 %v875
    %v955 = vpop.f32.mrf.mxu0
    %v956 = vadd.f32 0.0, %v955
    %v957 = vpop.f32.mrf.mxu0
    %v958 = vadd.f32 0.0, %v957
    %959 = vmatmul.bf16.gmra.mxu0 %v878
    %v960 = vpop.f32.mrf.mxu0
    %v961 = vadd.f32 0.0, %v960
    %v962 = vpop.f32.mrf.mxu0
    %v963 = vadd.f32 0.0, %v962
    %964 = vmatmul.bf16.gmra.mxu0 %v881
    %v965 = vpop.f32.mrf.mxu0
    %v966 = vadd.f32 0.0, %v965
    %v967 = vpop.f32.mrf.mxu0
    %v968 = vadd.f32 0.0, %v967
    %969 = vdwg.mxu0
    %v970 = vadd.f32 %v712, %v893
    %v971 = vadd.f32 %v713, %v922
    %v972 = vadd.f32 %v714, %v951
    %v973 = vadd.f32 %v715, %v895
    %v974 = vadd.f32 %v716, %v924
    %v975 = vadd.f32 %v717, %v953
    %v976 = vadd.f32 %v718, %v898
    %v977 = vadd.f32 %v719, %v927
    %v978 = vadd.f32 %v720, %v956
    %v979 = vadd.f32 %v721, %v900
    %v980 = vadd.f32 %v722, %v929
    %v981 = vadd.f32 %v723, %v958
    %v982 = vadd.f32 %v724, %v903
    %v983 = vadd.f32 %v725, %v932
    %v984 = vadd.f32 %v726, %v961
    %v985 = vadd.f32 %v727, %v905
    %v986 = vadd.f32 %v728, %v934
    %v987 = vadd.f32 %v729, %v963
    %v988 = vadd.f32 %v730, %v908
    %v989 = vadd.f32 %v731, %v937
    %v990 = vadd.f32 %v732, %v966
    %v991 = vadd.f32 %v733, %v910
    %v992 = vadd.f32 %v734, %v939
    %v993 = vadd.f32 %v735, %v968
    %v994 = vrot.slane %v118, 2
    %v995 = vrot.slane %v119, 2
    %v996 = vrot.slane %v120, 2
    %v997 = vrot.slane %v121, 2
    %v998 = vrot.slane %v122, 2
    %v999 = vrot.slane %v123, 2
    %v1000 = vrot.slane %v124, 2
    %v1001 = vrot.slane %v125, 2
    %v1002 = vrot.slane %v118, 6
    %v1003 = vrot.slane %v119, 6
    %v1004 = vrot.slane %v120, 6
    %v1005 = vrot.slane %v121, 6
    %v1006 = vrot.slane %v122, 6
    %v1007 = vrot.slane %v123, 6
    %v1008 = vrot.slane %v124, 6
    %v1009 = vrot.slane %v125, 6
    %vm1010 = vcmask 1041408
    %v1013 = vsel %vm1010, %v994, %v1002
    %v1016 = vsel %vm1010, %v995, %v1003
    %v1019 = vsel %vm1010, %v996, %v1004
    %v1022 = vsel %vm1010, %v997, %v1005
    %v1025 = vsel %vm1010, %v998, %v1006
    %v1028 = vsel %vm1010, %v999, %v1007
    %v1031 = vsel %vm1010, %v1000, %v1008
    %v1034 = vsel %vm1010, %v1001, %v1009
    %v1035 = vld [vmem:[#allocation5 + $0xc0] sm:$0xff]
    %v1036 = vld [vmem:[#allocation5 + $0xc8] sm:$0xf]
    %v1037 = vld [vmem:[#allocation5 + $0xcc] sm:$0xff]
    %v1038 = vld [vmem:[#allocation5 + $0xd4] sm:$0xf]
    %v1039 = vld [vmem:[#allocation5 + $0xd8] sm:$0xff]
    %v1040 = vld [vmem:[#allocation5 + $0xe0] sm:$0xf]
    %v1041 = vld [vmem:[#allocation5 + $0xe4] sm:$0xff]
    %v1042 = vld [vmem:[#allocation5 + $0xec] sm:$0xf]
    %v1051 = vunpack.c.l.b16 %v1013
    %v1052 = vunpack.c.l.b16 %v1016
    %v1053 = vunpack.c.l.b16 %v1019
    %v1054 = vunpack.c.l.b16 %v1022
    %v1055 = vunpack.c.l.b16 %v1025
    %v1056 = vunpack.c.l.b16 %v1028
    %v1057 = vunpack.c.l.b16 %v1031
    %v1058 = vunpack.c.l.b16 %v1034
    %v1059 = vpack.c.b16 %v1052, %v1051
    %v1060 = vpack.c.b16 %v1054, %v1053
    %v1061 = vpack.c.b16 %v1056, %v1055
    %v1062 = vpack.c.b16 %v1058, %v1057
    %v1071 = vunpack.c.l.b16 %v1035
    %v1072 = vunpack.c.h.b16 %v1035
    %v1073 = vunpack.c.l.b16 %v1036
    %v1074 = vunpack.c.l.b16 %v1037
    %v1075 = vunpack.c.h.b16 %v1037
    %v1076 = vunpack.c.l.b16 %v1038
    %v1077 = vunpack.c.l.b16 %v1039
    %v1078 = vunpack.c.h.b16 %v1039
    %v1079 = vunpack.c.l.b16 %v1040
    %v1080 = vunpack.c.l.b16 %v1041
    %v1081 = vunpack.c.h.b16 %v1041
    %v1082 = vunpack.c.l.b16 %v1042
    %v1083 = vpack.c.b16 %v1074, %v1071
    %v1084 = vpack.c.b16 %v1075, %v1072
    %v1085 = vpack.c.b16 %v1076, %v1073
    %v1086 = vpack.c.b16 %v1080, %v1077
    %v1087 = vpack.c.b16 %v1081, %v1078
    %v1088 = vpack.c.b16 %v1082, %v1079
    %v1096 = vsel %vm277, %v1059, 0
    %v1099 = vsel %vm277, %v1060, 0
    %v1102 = vsel %vm277, %v1061, 0
    %v1105 = vsel %vm277, %v1062, 0
    %1107 = vmatpush.bf16.msra.mxu0 0
    %1108 = vmatpush.bf16.msra.mxu0 0
    %1109 = vmatpush.bf16.msra.mxu0 0
    %1110 = vmatpush.bf16.msra.mxu0 0
    %1111 = vmatpush.bf16.msra.mxu0 0
    %1112 = vmatpush.bf16.msra.mxu0 0
    %1113 = vmatpush.bf16.msra.mxu0 %v1086
    %1114 = vmatpush.bf16.msra.mxu0 %v1083
    %1115 = vmatmul.bf16.gmra.mxu0 %v1096
    %v1116 = vpop.f32.mrf.mxu0
    %v1117 = vadd.f32 0.0, %v1116
    %v1118 = vpop.f32.mrf.mxu0
    %v1119 = vadd.f32 0.0, %v1118
    %1120 = vmatmul.bf16.gmra.mxu0 %v1099
    %v1121 = vpop.f32.mrf.mxu0
    %v1122 = vadd.f32 0.0, %v1121
    %v1123 = vpop.f32.mrf.mxu0
    %v1124 = vadd.f32 0.0, %v1123
    %1125 = vmatmul.bf16.gmra.mxu0 %v1102
    %v1126 = vpop.f32.mrf.mxu0
    %v1127 = vadd.f32 0.0, %v1126
    %v1128 = vpop.f32.mrf.mxu0
    %v1129 = vadd.f32 0.0, %v1128
    %1130 = vmatmul.bf16.gmra.mxu0 %v1105
    %v1131 = vpop.f32.mrf.mxu0
    %v1132 = vadd.f32 0.0, %v1131
    %v1133 = vpop.f32.mrf.mxu0
    %v1134 = vadd.f32 0.0, %v1133
    %1135 = vdwg.mxu0
    %1136 = vmatpush.bf16.msra.mxu0 0
    %1137 = vmatpush.bf16.msra.mxu0 0
    %1138 = vmatpush.bf16.msra.mxu0 0
    %1139 = vmatpush.bf16.msra.mxu0 0
    %1140 = vmatpush.bf16.msra.mxu0 0
    %1141 = vmatpush.bf16.msra.mxu0 0
    %1142 = vmatpush.bf16.msra.mxu0 %v1087
    %1143 = vmatpush.bf16.msra.mxu0 %v1084
    %1144 = vmatmul.bf16.gmra.mxu0 %v1096
    %v1145 = vpop.f32.mrf.mxu0
    %v1146 = vadd.f32 0.0, %v1145
    %v1147 = vpop.f32.mrf.mxu0
    %v1148 = vadd.f32 0.0, %v1147
    %1149 = vmatmul.bf16.gmra.mxu0 %v1099
    %v1150 = vpop.f32.mrf.mxu0
    %v1151 = vadd.f32 0.0, %v1150
    %v1152 = vpop.f32.mrf.mxu0
    %v1153 = vadd.f32 0.0, %v1152
    %1154 = vmatmul.bf16.gmra.mxu0 %v1102
    %v1155 = vpop.f32.mrf.mxu0
    %v1156 = vadd.f32 0.0, %v1155
    %v1157 = vpop.f32.mrf.mxu0
    %v1158 = vadd.f32 0.0, %v1157
    %1159 = vmatmul.bf16.gmra.mxu0 %v1105
    %v1160 = vpop.f32.mrf.mxu0
    %v1161 = vadd.f32 0.0, %v1160
    %v1162 = vpop.f32.mrf.mxu0
    %v1163 = vadd.f32 0.0, %v1162
    %1164 = vdwg.mxu0
    %1165 = vmatpush.bf16.msra.mxu0 0
    %1166 = vmatpush.bf16.msra.mxu0 0
    %1167 = vmatpush.bf16.msra.mxu0 0
    %1168 = vmatpush.bf16.msra.mxu0 0
    %1169 = vmatpush.bf16.msra.mxu0 0
    %1170 = vmatpush.bf16.msra.mxu0 0
    %1171 = vmatpush.bf16.msra.mxu0 %v1088
    %1172 = vmatpush.bf16.msra.mxu0 %v1085
    %1173 = vmatmul.bf16.gmra.mxu0 %v1096
    %v1174 = vpop.f32.mrf.mxu0
    %v1175 = vadd.f32 0.0, %v1174
    %v1176 = vpop.f32.mrf.mxu0
    %v1177 = vadd.f32 0.0, %v1176
    %1178 = vmatmul.bf16.gmra.mxu0 %v1099
    %v1179 = vpop.f32.mrf.mxu0
    %v1180 = vadd.f32 0.0, %v1179
    %v1181 = vpop.f32.mrf.mxu0
    %v1182 = vadd.f32 0.0, %v1181
    %1183 = vmatmul.bf16.gmra.mxu0 %v1102
    %v1184 = vpop.f32.mrf.mxu0
    %v1185 = vadd.f32 0.0, %v1184
    %v1186 = vpop.f32.mrf.mxu0
    %v1187 = vadd.f32 0.0, %v1186
    %1188 = vmatmul.bf16.gmra.mxu0 %v1105
    %v1189 = vpop.f32.mrf.mxu0
    %v1190 = vadd.f32 0.0, %v1189
    %v1191 = vpop.f32.mrf.mxu0
    %v1192 = vadd.f32 0.0, %v1191
    %1193 = vdwg.mxu0
    %v1194 = vadd.f32 %v970, %v1117
    %v1195 = vadd.f32 %v971, %v1146
    %v1196 = vadd.f32 %v972, %v1175
    %v1197 = vadd.f32 %v973, %v1119
    %v1198 = vadd.f32 %v974, %v1148
    %v1199 = vadd.f32 %v975, %v1177
    %v1200 = vadd.f32 %v976, %v1122
    %v1201 = vadd.f32 %v977, %v1151
    %v1202 = vadd.f32 %v978, %v1180
    %v1203 = vadd.f32 %v979, %v1124
    %v1204 = vadd.f32 %v980, %v1153
    %v1205 = vadd.f32 %v981, %v1182
    %v1206 = vadd.f32 %v982, %v1127
    %v1207 = vadd.f32 %v983, %v1156
    %v1208 = vadd.f32 %v984, %v1185
    %v1209 = vadd.f32 %v985, %v1129
    %v1210 = vadd.f32 %v986, %v1158
    %v1211 = vadd.f32 %v987, %v1187
    %v1212 = vadd.f32 %v988, %v1132
    %v1213 = vadd.f32 %v989, %v1161
    %v1214 = vadd.f32 %v990, %v1190
    %v1215 = vadd.f32 %v991, %v1134
    %v1216 = vadd.f32 %v992, %v1163
    %v1217 = vadd.f32 %v993, %v1192
    %v1218 = vld [vmem:[#allocation7] sm:$0xff]
    %v1219 = vld [vmem:[#allocation7 + $0x8] sm:$0xff]
    %v1220 = vld [vmem:[#allocation7 + $0x10] sm:$0xff]
    %v1221 = vadd.f32 %v1194, %v1218
    %v1222 = vadd.f32 %v1195, %v1219
    %v1223 = vadd.f32 %v1196, %v1220
    %v1224 = vadd.f32 %v1197, %v1218
    %v1225 = vadd.f32 %v1198, %v1219
    %v1226 = vadd.f32 %v1199, %v1220
    %v1227 = vadd.f32 %v1200, %v1218
    %v1228 = vadd.f32 %v1201, %v1219
    %v1229 = vadd.f32 %v1202, %v1220
    %v1230 = vadd.f32 %v1203, %v1218
    %v1231 = vadd.f32 %v1204, %v1219
    %v1232 = vadd.f32 %v1205, %v1220
    %v1233 = vadd.f32 %v1206, %v1218
    %v1234 = vadd.f32 %v1207, %v1219
    %v1235 = vadd.f32 %v1208, %v1220
    %v1236 = vadd.f32 %v1209, %v1218
    %v1237 = vadd.f32 %v1210, %v1219
    %v1238 = vadd.f32 %v1211, %v1220
    %v1239 = vadd.f32 %v1212, %v1218
    %v1240 = vadd.f32 %v1213, %v1219
    %v1241 = vadd.f32 %v1214, %v1220
    %v1242 = vadd.f32 %v1215, %v1218
    %v1243 = vadd.f32 %v1216, %v1219
    %v1244 = vadd.f32 %v1217, %v1220
    %v1245 = vmax.f32 %v1221, 0.0
    %v1246 = vmax.f32 %v1222, 0.0
    %v1247 = vmax.f32 %v1223, 0.0
    %v1248 = vmax.f32 %v1224, 0.0
    %v1249 = vmax.f32 %v1225, 0.0
    %v1250 = vmax.f32 %v1226, 0.0
    %v1251 = vmax.f32 %v1227, 0.0
    %v1252 = vmax.f32 %v1228, 0.0
    %v1253 = vmax.f32 %v1229, 0.0
    %v1254 = vmax.f32 %v1230, 0.0
    %v1255 = vmax.f32 %v1231, 0.0
    %v1256 = vmax.f32 %v1232, 0.0
    %v1257 = vmax.f32 %v1233, 0.0
    %v1258 = vmax.f32 %v1234, 0.0
    %v1259 = vmax.f32 %v1235, 0.0
    %v1260 = vmax.f32 %v1236, 0.0
    %v1261 = vmax.f32 %v1237, 0.0
    %v1262 = vmax.f32 %v1238, 0.0
    %v1263 = vmax.f32 %v1239, 0.0
    %v1264 = vmax.f32 %v1240, 0.0
    %v1265 = vmax.f32 %v1241, 0.0
    %v1266 = vmax.f32 %v1242, 0.0
    %v1267 = vmax.f32 %v1243, 0.0
    %v1268 = vmax.f32 %v1244, 0.0
    %v1269 = vrot.slane %v1245, 4
    %v1270 = vmax.f32 %v1245, %v1269
    %v1271 = vrot.slane %v1270, 2
    %v1272 = vmax.f32 %v1270, %v1271
    %v1273 = vrot.slane %v1272, 1
    %v1274 = vmax.f32 %v1272, %v1273
    %v1275 = vrot.slane %v1246, 4
    %v1276 = vmax.f32 %v1246, %v1275
    %v1277 = vrot.slane %v1276, 2
    %v1278 = vmax.f32 %v1276, %v1277
    %v1279 = vrot.slane %v1278, 1
    %v1280 = vmax.f32 %v1278, %v1279
    %v1281 = vrot.slane %v1247, 4
    %v1282 = vmax.f32 %v1247, %v1281
    %v1283 = vrot.slane %v1282, 2
    %v1284 = vmax.f32 %v1282, %v1283
    %v1285 = vrot.slane %v1284, 1
    %v1286 = vmax.f32 %v1284, %v1285
    %v1287 = vrot.slane %v1248, 4
    %v1288 = vmax.f32 %v1248, %v1287
    %v1289 = vrot.slane %v1288, 2
    %v1290 = vmax.f32 %v1288, %v1289
    %v1291 = vrot.slane %v1290, 1
    %v1292 = vmax.f32 %v1290, %v1291
    %v1293 = vrot.slane %v1249, 4
    %v1294 = vmax.f32 %v1249, %v1293
    %v1295 = vrot.slane %v1294, 2
    %v1296 = vmax.f32 %v1294, %v1295
    %v1297 = vrot.slane %v1296, 1
    %v1298 = vmax.f32 %v1296, %v1297
    %v1299 = vrot.slane %v1250, 4
    %v1300 = vmax.f32 %v1250, %v1299
    %v1301 = vrot.slane %v1300, 2
    %v1302 = vmax.f32 %v1300, %v1301
    %v1303 = vrot.slane %v1302, 1
    %v1304 = vmax.f32 %v1302, %v1303
    %v1305 = vrot.slane %v1251, 4
    %v1306 = vmax.f32 %v1251, %v1305
    %v1307 = vrot.slane %v1306, 2
    %v1308 = vmax.f32 %v1306, %v1307
    %v1309 = vrot.slane %v1308, 1
    %v1310 = vmax.f32 %v1308, %v1309
    %v1311 = vrot.slane %v1252, 4
    %v1312 = vmax.f32 %v1252, %v1311
    %v1313 = vrot.slane %v1312, 2
    %v1314 = vmax.f32 %v1312, %v1313
    %v1315 = vrot.slane %v1314, 1
    %v1316 = vmax.f32 %v1314, %v1315
    %v1317 = vrot.slane %v1253, 4
    %v1318 = vmax.f32 %v1253, %v1317
    %v1319 = vrot.slane %v1318, 2
    %v1320 = vmax.f32 %v1318, %v1319
    %v1321 = vrot.slane %v1320, 1
    %v1322 = vmax.f32 %v1320, %v1321
    %v1323 = vrot.slane %v1254, 4
    %v1324 = vmax.f32 %v1254, %v1323
    %v1325 = vrot.slane %v1324, 2
    %v1326 = vmax.f32 %v1324, %v1325
    %v1327 = vrot.slane %v1326, 1
    %v1328 = vmax.f32 %v1326, %v1327
    %v1329 = vrot.slane %v1255, 4
    %v1330 = vmax.f32 %v1255, %v1329
    %v1331 = vrot.slane %v1330, 2
    %v1332 = vmax.f32 %v1330, %v1331
    %v1333 = vrot.slane %v1332, 1
    %v1334 = vmax.f32 %v1332, %v1333
    %v1335 = vrot.slane %v1256, 4
    %v1336 = vmax.f32 %v1256, %v1335
    %v1337 = vrot.slane %v1336, 2
    %v1338 = vmax.f32 %v1336, %v1337
    %v1339 = vrot.slane %v1338, 1
    %v1340 = vmax.f32 %v1338, %v1339
    %v1341 = vrot.slane %v1257, 4
    %v1342 = vmax.f32 %v1257, %v1341
    %v1343 = vrot.slane %v1342, 2
    %v1344 = vmax.f32 %v1342, %v1343
    %v1345 = vrot.slane %v1344, 1
    %v1346 = vmax.f32 %v1344, %v1345
    %v1347 = vrot.slane %v1258, 4
    %v1348 = vmax.f32 %v1258, %v1347
    %v1349 = vrot.slane %v1348, 2
    %v1350 = vmax.f32 %v1348, %v1349
    %v1351 = vrot.slane %v1350, 1
    %v1352 = vmax.f32 %v1350, %v1351
    %v1353 = vrot.slane %v1259, 4
    %v1354 = vmax.f32 %v1259, %v1353
    %v1355 = vrot.slane %v1354, 2
    %v1356 = vmax.f32 %v1354, %v1355
    %v1357 = vrot.slane %v1356, 1
    %v1358 = vmax.f32 %v1356, %v1357
    %v1359 = vrot.slane %v1260, 4
    %v1360 = vmax.f32 %v1260, %v1359
    %v1361 = vrot.slane %v1360, 2
    %v1362 = vmax.f32 %v1360, %v1361
    %v1363 = vrot.slane %v1362, 1
    %v1364 = vmax.f32 %v1362, %v1363
    %v1365 = vrot.slane %v1261, 4
    %v1366 = vmax.f32 %v1261, %v1365
    %v1367 = vrot.slane %v1366, 2
    %v1368 = vmax.f32 %v1366, %v1367
    %v1369 = vrot.slane %v1368, 1
    %v1370 = vmax.f32 %v1368, %v1369
    %v1371 = vrot.slane %v1262, 4
    %v1372 = vmax.f32 %v1262, %v1371
    %v1373 = vrot.slane %v1372, 2
    %v1374 = vmax.f32 %v1372, %v1373
    %v1375 = vrot.slane %v1374, 1
    %v1376 = vmax.f32 %v1374, %v1375
    %v1377 = vrot.slane %v1263, 4
    %v1378 = vmax.f32 %v1263, %v1377
    %v1379 = vrot.slane %v1378, 2
    %v1380 = vmax.f32 %v1378, %v1379
    %v1381 = vrot.slane %v1380, 1
    %v1382 = vmax.f32 %v1380, %v1381
    %v1383 = vrot.slane %v1264, 4
    %v1384 = vmax.f32 %v1264, %v1383
    %v1385 = vrot.slane %v1384, 2
    %v1386 = vmax.f32 %v1384, %v1385
    %v1387 = vrot.slane %v1386, 1
    %v1388 = vmax.f32 %v1386, %v1387
    %v1389 = vrot.slane %v1265, 4
    %v1390 = vmax.f32 %v1265, %v1389
    %v1391 = vrot.slane %v1390, 2
    %v1392 = vmax.f32 %v1390, %v1391
    %v1393 = vrot.slane %v1392, 1
    %v1394 = vmax.f32 %v1392, %v1393
    %v1395 = vrot.slane %v1266, 4
    %v1396 = vmax.f32 %v1266, %v1395
    %v1397 = vrot.slane %v1396, 2
    %v1398 = vmax.f32 %v1396, %v1397
    %v1399 = vrot.slane %v1398, 1
    %v1400 = vmax.f32 %v1398, %v1399
    %v1401 = vrot.slane %v1267, 4
    %v1402 = vmax.f32 %v1267, %v1401
    %v1403 = vrot.slane %v1402, 2
    %v1404 = vmax.f32 %v1402, %v1403
    %v1405 = vrot.slane %v1404, 1
    %v1406 = vmax.f32 %v1404, %v1405
    %v1407 = vrot.slane %v1268, 4
    %v1408 = vmax.f32 %v1268, %v1407
    %v1409 = vrot.slane %v1408, 2
    %v1410 = vmax.f32 %v1408, %v1409
    %v1411 = vrot.slane %v1410, 1
    %v1412 = vmax.f32 %v1410, %v1411
    %v1413 = vpack.c.bf16 %v1274, %v1274
    %v1414 = vpack.c.bf16 %v1280, %v1280
    %v1415 = vpack.c.bf16 %v1286, %v1286
    %v1416 = vpack.c.bf16 %v1292, %v1292
    %v1417 = vpack.c.bf16 %v1298, %v1298
    %v1418 = vpack.c.bf16 %v1304, %v1304
    %v1419 = vpack.c.bf16 %v1310, %v1310
    %v1420 = vpack.c.bf16 %v1316, %v1316
    %v1421 = vpack.c.bf16 %v1322, %v1322
    %v1422 = vpack.c.bf16 %v1328, %v1328
    %v1423 = vpack.c.bf16 %v1334, %v1334
    %v1424 = vpack.c.bf16 %v1340, %v1340
    %v1425 = vpack.c.bf16 %v1346, %v1346
    %v1426 = vpack.c.bf16 %v1352, %v1352
    %v1427 = vpack.c.bf16 %v1358, %v1358
    %v1428 = vpack.c.bf16 %v1364, %v1364
    %v1429 = vpack.c.bf16 %v1370, %v1370
    %v1430 = vpack.c.bf16 %v1376, %v1376
    %v1431 = vpack.c.bf16 %v1382, %v1382
    %v1432 = vpack.c.bf16 %v1388, %v1388
    %v1433 = vpack.c.bf16 %v1394, %v1394
    %v1434 = vpack.c.bf16 %v1400, %v1400
    %v1435 = vpack.c.bf16 %v1406, %v1406
    %v1436 = vpack.c.bf16 %v1412, %v1412
    %v1437 = vld [vmem:[#allocation8] sm:$0xf]
    %v1438 = vld [vmem:[#allocation8 + $0x4] sm:$0xf]
    %v1439 = vld [vmem:[#allocation8 + $0x8] sm:$0xf]
    %v1440 = vld [vmem:[#allocation8 + $0xc] sm:$0xf]
    %v1441 = vld [vmem:[#allocation8 + $0x10] sm:$0xf]
    %v1442 = vld [vmem:[#allocation8 + $0x14] sm:$0xf]
    %v1443 = vld [vmem:[#allocation8 + $0x18] sm:$0xf]
    %v1444 = vld [vmem:[#allocation8 + $0x1c] sm:$0xf]
    %v1445 = vld [vmem:[#allocation8 + $0x20] sm:$0xf]
    %v1446 = vld [vmem:[#allocation8 + $0x24] sm:$0xf]
    %v1447 = vld [vmem:[#allocation8 + $0x28] sm:$0xf]
    %v1448 = vld [vmem:[#allocation8 + $0x2c] sm:$0xf]
    %v1449 = vld [vmem:[#allocation8 + $0x30] sm:$0xf]
    %v1450 = vld [vmem:[#allocation8 + $0x34] sm:$0xf]
    %v1451 = vld [vmem:[#allocation8 + $0x38] sm:$0xf]
    %v1452 = vld [vmem:[#allocation8 + $0x3c] sm:$0xf]
    %v1453 = vld [vmem:[#allocation8 + $0x40] sm:$0xf]
    %v1454 = vld [vmem:[#allocation8 + $0x44] sm:$0xf]
    %v1455 = vld [vmem:[#allocation8 + $0x48] sm:$0xf]
    %v1456 = vld [vmem:[#allocation8 + $0x4c] sm:$0xf]
    %v1457 = vld [vmem:[#allocation8 + $0x50] sm:$0xf]
    %v1458 = vld [vmem:[#allocation8 + $0x54] sm:$0xf]
    %v1459 = vld [vmem:[#allocation8 + $0x58] sm:$0xf]
    %v1460 = vld [vmem:[#allocation8 + $0x5c] sm:$0xf]
    %v1461 = vld [vmem:[#allocation8 + $0x60] sm:$0xf]
    %v1462 = vld [vmem:[#allocation8 + $0x64] sm:$0xf]
    %v1463 = vld [vmem:[#allocation8 + $0x68] sm:$0xf]
    %v1464 = vld [vmem:[#allocation8 + $0x6c] sm:$0xf]
    %v1465 = vld [vmem:[#allocation8 + $0x70] sm:$0xf]
    %v1466 = vld [vmem:[#allocation8 + $0x74] sm:$0xf]
    %v1467 = vld [vmem:[#allocation8 + $0x78] sm:$0xf]
    %v1468 = vld [vmem:[#allocation8 + $0x7c] sm:$0xf]
    %v1469 = vld [vmem:[#allocation8 + $0x80] sm:$0xf]
    %v1470 = vld [vmem:[#allocation8 + $0x84] sm:$0xf]
    %v1471 = vld [vmem:[#allocation8 + $0x88] sm:$0xf]
    %v1472 = vld [vmem:[#allocation8 + $0x8c] sm:$0xf]
    %v1473 = vld [vmem:[#allocation8 + $0x90] sm:$0xf]
    %v1474 = vld [vmem:[#allocation8 + $0x94] sm:$0xf]
    %v1475 = vld [vmem:[#allocation8 + $0x98] sm:$0xf]
    %v1476 = vld [vmem:[#allocation8 + $0x9c] sm:$0xf]
    %v1477 = vld [vmem:[#allocation8 + $0xa0] sm:$0xf]
    %v1478 = vld [vmem:[#allocation8 + $0xa4] sm:$0xf]
    %v1479 = vld [vmem:[#allocation8 + $0xa8] sm:$0xf]
    %v1480 = vld [vmem:[#allocation8 + $0xac] sm:$0xf]
    %v1481 = vld [vmem:[#allocation8 + $0xb0] sm:$0xf]
    %v1482 = vld [vmem:[#allocation8 + $0xb4] sm:$0xf]
    %v1483 = vld [vmem:[#allocation8 + $0xb8] sm:$0xf]
    %v1484 = vld [vmem:[#allocation8 + $0xbc] sm:$0xf]
    %v1485 = vld [vmem:[%s4] sm:$0x1]
    %v1487 = vperm.slane %v1485, 0
    %v1513 = vunpack.c.l.b16 %v1413
    %v1514 = vunpack.c.l.b16 %v1414
    %v1515 = vunpack.c.l.b16 %v1415
    %v1516 = vunpack.c.l.b16 %v1416
    %v1517 = vunpack.c.l.b16 %v1417
    %v1518 = vunpack.c.l.b16 %v1418
    %v1519 = vunpack.c.l.b16 %v1419
    %v1520 = vunpack.c.l.b16 %v1420
    %v1521 = vunpack.c.l.b16 %v1421
    %v1522 = vunpack.c.l.b16 %v1422
    %v1523 = vunpack.c.l.b16 %v1423
    %v1524 = vunpack.c.l.b16 %v1424
    %v1525 = vunpack.c.l.b16 %v1425
    %v1526 = vunpack.c.l.b16 %v1426
    %v1527 = vunpack.c.l.b16 %v1427
    %v1528 = vunpack.c.l.b16 %v1428
    %v1529 = vunpack.c.l.b16 %v1429
    %v1530 = vunpack.c.l.b16 %v1430
    %v1531 = vunpack.c.l.b16 %v1431
    %v1532 = vunpack.c.l.b16 %v1432
    %v1533 = vunpack.c.l.b16 %v1433
    %v1534 = vunpack.c.l.b16 %v1434
    %v1535 = vunpack.c.l.b16 %v1435
    %v1536 = vunpack.c.l.b16 %v1436
    %vm1537 = vcmask 1041409
    %v1538 = vsel %vm1537, %v1516, %v1513
    %vm1539 = vcmask 1042434
    %v1540 = vsel %vm1539, %v1519, %v1538
    %vm1541 = vcmask 1043459
    %v1542 = vsel %vm1541, %v1522, %v1540
    %vm1543 = vcmask 1044484
    %v1544 = vsel %vm1543, %v1525, %v1542
    %vm1545 = vcmask 1045509
    %v1546 = vsel %vm1545, %v1528, %v1544
    %vm1547 = vcmask 1046534
    %v1548 = vsel %vm1547, %v1531, %v1546
    %vm1549 = vcmask 1047559
    %v1550 = vsel %vm1549, %v1534, %v1548
    %v1551 = vsel %vm1537, %v1517, %v1514
    %v1552 = vsel %vm1539, %v1520, %v1551
    %v1553 = vsel %vm1541, %v1523, %v1552
    %v1554 = vsel %vm1543, %v1526, %v1553
    %v1555 = vsel %vm1545, %v1529, %v1554
    %v1556 = vsel %vm1547, %v1532, %v1555
    %v1557 = vsel %vm1549, %v1535, %v1556
    %v1558 = vsel %vm1537, %v1518, %v1515
    %v1559 = vsel %vm1539, %v1521, %v1558
    %v1560 = vsel %vm1541, %v1524, %v1559
    %v1561 = vsel %vm1543, %v1527, %v1560
    %v1562 = vsel %vm1545, %v1530, %v1561
    %v1563 = vsel %vm1547, %v1533, %v1562
    %v1564 = vsel %vm1549, %v1536, %v1563
    %v1565 = vpack.c.b16 %v1550, %v1550
    %v1566 = vpack.c.b16 %v1557, %v1557
    %v1567 = vpack.c.b16 %v1564, %v1564
    %v1619 = vunpack.c.l.b16 %v1437
    %v1620 = vunpack.c.l.b16 %v1438
    %v1621 = vunpack.c.l.b16 %v1439
    %v1622 = vunpack.c.l.b16 %v1440
    %v1623 = vunpack.c.l.b16 %v1441
    %v1624 = vunpack.c.l.b16 %v1442
    %v1625 = vunpack.c.l.b16 %v1443
    %v1626 = vunpack.c.l.b16 %v1444
    %v1627 = vunpack.c.l.b16 %v1445
    %v1628 = vunpack.c.l.b16 %v1446
    %v1629 = vunpack.c.l.b16 %v1447
    %v1630 = vunpack.c.l.b16 %v1448
    %v1631 = vunpack.c.l.b16 %v1449
    %v1632 = vunpack.c.l.b16 %v1450
    %v1633 = vunpack.c.l.b16 %v1451
    %v1634 = vunpack.c.l.b16 %v1452
    %v1635 = vunpack.c.l.b16 %v1453
    %v1636 = vunpack.c.l.b16 %v1454
    %v1637 = vunpack.c.l.b16 %v1455
    %v1638 = vunpack.c.l.b16 %v1456
    %v1639 = vunpack.c.l.b16 %v1457
    %v1640 = vunpack.c.l.b16 %v1458
    %v1641 = vunpack.c.l.b16 %v1459
    %v1642 = vunpack.c.l.b16 %v1460
    %v1643 = vunpack.c.l.b16 %v1461
    %v1644 = vunpack.c.l.b16 %v1462
    %v1645 = vunpack.c.l.b16 %v1463
    %v1646 = vunpack.c.l.b16 %v1464
    %v1647 = vunpack.c.l.b16 %v1465
    %v1648 = vunpack.c.l.b16 %v1466
    %v1649 = vunpack.c.l.b16 %v1467
    %v1650 = vunpack.c.l.b16 %v1468
    %v1651 = vunpack.c.l.b16 %v1469
    %v1652 = vunpack.c.l.b16 %v1470
    %v1653 = vunpack.c.l.b16 %v1471
    %v1654 = vunpack.c.l.b16 %v1472
    %v1655 = vunpack.c.l.b16 %v1473
    %v1656 = vunpack.c.l.b16 %v1474
    %v1657 = vunpack.c.l.b16 %v1475
    %v1658 = vunpack.c.l.b16 %v1476
    %v1659 = vunpack.c.l.b16 %v1477
    %v1660 = vunpack.c.l.b16 %v1478
    %v1661 = vunpack.c.l.b16 %v1479
    %v1662 = vunpack.c.l.b16 %v1480
    %v1663 = vunpack.c.l.b16 %v1481
    %v1664 = vunpack.c.l.b16 %v1482
    %v1665 = vunpack.c.l.b16 %v1483
    %v1666 = vunpack.c.l.b16 %v1484
    %v1667 = vpack.c.b16 %v1620, %v1619
    %v1668 = vpack.c.b16 %v1622, %v1621
    %v1669 = vpack.c.b16 %v1624, %v1623
    %v1670 = vpack.c.b16 %v1626, %v1625
    %v1671 = vpack.c.b16 %v1628, %v1627
    %v1672 = vpack.c.b16 %v1630, %v1629
    %v1673 = vpack.c.b16 %v1632, %v1631
    %v1674 = vpack.c.b16 %v1634, %v1633
    %v1675 = vpack.c.b16 %v1636, %v1635
    %v1676 = vpack.c.b16 %v1638, %v1637
    %v1677 = vpack.c.b16 %v1640, %v1639
    %v1678 = vpack.c.b16 %v1642, %v1641
    %v1679 = vpack.c.b16 %v1644, %v1643
    %v1680 = vpack.c.b16 %v1646, %v1645
    %v1681 = vpack.c.b16 %v1648, %v1647
    %v1682 = vpack.c.b16 %v1650, %v1649
    %v1683 = vpack.c.b16 %v1652, %v1651
    %v1684 = vpack.c.b16 %v1654, %v1653
    %v1685 = vpack.c.b16 %v1656, %v1655
    %v1686 = vpack.c.b16 %v1658, %v1657
    %v1687 = vpack.c.b16 %v1660, %v1659
    %v1688 = vpack.c.b16 %v1662, %v1661
    %v1689 = vpack.c.b16 %v1664, %v1663
    %v1690 = vpack.c.b16 %v1666, %v1665
    %1715 = vmatpush.bf16.msra.mxu0 %v1674
    %1716 = vmatpush.bf16.msra.mxu0 %v1673
    %1717 = vmatpush.bf16.msra.mxu0 %v1672
    %1718 = vmatpush.bf16.msra.mxu0 %v1671
    %1719 = vmatpush.bf16.msra.mxu0 %v1670
    %1720 = vmatpush.bf16.msra.mxu0 %v1669
    %1721 = vmatpush.bf16.msra.mxu0 %v1668
    %1722 = vmatpush.bf16.msra.mxu0 %v1667
    %1723 = vmatmul.bf16.gmra.mxu0 %v1565
    %v1724 = vpop.f32.mrf.mxu0
    %v1725 = vadd.f32 %v1487, %v1724
    %v1726 = vpop.f32.mrf.mxu0
    %1727 = vdwg.mxu0
    %1728 = vmatpush.bf16.msra.mxu0 %v1682
    %1729 = vmatpush.bf16.msra.mxu0 %v1681
    %1730 = vmatpush.bf16.msra.mxu0 %v1680
    %1731 = vmatpush.bf16.msra.mxu0 %v1679
    %1732 = vmatpush.bf16.msra.mxu0 %v1678
    %1733 = vmatpush.bf16.msra.mxu0 %v1677
    %1734 = vmatpush.bf16.msra.mxu0 %v1676
    %1735 = vmatpush.bf16.msra.mxu0 %v1675
    %1736 = vmatmul.bf16.gmra.mxu0 %v1566
    %v1737 = vpop.f32.mrf.mxu0
    %v1738 = vadd.f32 %v1725, %v1737
    %v1739 = vpop.f32.mrf.mxu0
    %1740 = vdwg.mxu0
    %1741 = vmatpush.bf16.msra.mxu0 %v1690
    %1742 = vmatpush.bf16.msra.mxu0 %v1689
    %1743 = vmatpush.bf16.msra.mxu0 %v1688
    %1744 = vmatpush.bf16.msra.mxu0 %v1687
    %1745 = vmatpush.bf16.msra.mxu0 %v1686
    %1746 = vmatpush.bf16.msra.mxu0 %v1685
    %1747 = vmatpush.bf16.msra.mxu0 %v1684
    %1748 = vmatpush.bf16.msra.mxu0 %v1683
    %1749 = vmatmul.bf16.gmra.mxu0 %v1567
    %v1750 = vpop.f32.mrf.mxu0
    %v1751 = vadd.f32 %v1738, %v1750
    %v1752 = vpop.f32.mrf.mxu0
    %1753 = vdwg.mxu0
    %1754 = vst [vmem:[#allocation10] sm:$0xff] %v1751
    %v1755 = vmul.f32 %v1274, %v1274
    %v1756 = vmul.f32 %v1280, %v1280
    %v1757 = vmul.f32 %v1286, %v1286
    %v1758 = vmul.f32 %v1292, %v1292
    %v1759 = vmul.f32 %v1298, %v1298
    %v1760 = vmul.f32 %v1304, %v1304
    %v1761 = vmul.f32 %v1310, %v1310
    %v1762 = vmul.f32 %v1316, %v1316
    %v1763 = vmul.f32 %v1322, %v1322
    %v1764 = vmul.f32 %v1328, %v1328
    %v1765 = vmul.f32 %v1334, %v1334
    %v1766 = vmul.f32 %v1340, %v1340
    %v1767 = vmul.f32 %v1346, %v1346
    %v1768 = vmul.f32 %v1352, %v1352
    %v1769 = vmul.f32 %v1358, %v1358
    %v1770 = vmul.f32 %v1364, %v1364
    %v1771 = vmul.f32 %v1370, %v1370
    %v1772 = vmul.f32 %v1376, %v1376
    %v1773 = vmul.f32 %v1382, %v1382
    %v1774 = vmul.f32 %v1388, %v1388
    %v1775 = vmul.f32 %v1394, %v1394
    %v1776 = vmul.f32 %v1400, %v1400
    %v1777 = vmul.f32 %v1406, %v1406
    %v1778 = vmul.f32 %v1412, %v1412
    %v1803 = vsel %vm1537, %v1758, %v1755
    %v1804 = vsel %vm1539, %v1761, %v1803
    %v1805 = vsel %vm1541, %v1764, %v1804
    %v1806 = vsel %vm1543, %v1767, %v1805
    %v1807 = vsel %vm1545, %v1770, %v1806
    %v1808 = vsel %vm1547, %v1773, %v1807
    %v1809 = vsel %vm1549, %v1776, %v1808
    %v1810 = vsel %vm1537, %v1759, %v1756
    %v1811 = vsel %vm1539, %v1762, %v1810
    %v1812 = vsel %vm1541, %v1765, %v1811
    %v1813 = vsel %vm1543, %v1768, %v1812
    %v1814 = vsel %vm1545, %v1771, %v1813
    %v1815 = vsel %vm1547, %v1774, %v1814
    %v1816 = vsel %vm1549, %v1777, %v1815
    %v1817 = vsel %vm1537, %v1760, %v1757
    %v1818 = vsel %vm1539, %v1763, %v1817
    %v1819 = vsel %vm1541, %v1766, %v1818
    %v1820 = vsel %vm1543, %v1769, %v1819
    %v1821 = vsel %vm1545, %v1772, %v1820
    %v1822 = vsel %vm1547, %v1775, %v1821
    %v1823 = vsel %vm1549, %v1778, %v1822
    %v1827 = vadd.f32 %v1809, %v1816
    %v1828 = vadd.f32 %v1827, %v1823
    %1829 = vadd.xlane.f32.xlu0 %v1828
    %v1830 = vpop.xlane.xlu0 %1829
    %v1831 = vmax.f32 %v1830, 1e-24
    %v1832 = vrsqrt.pop %v1831
    %v1833 = vmul.f32 %v1832, %v1831
    %v1834 = vmul.f32 %v1833, %v1832
    %v1835 = vmul.f32 0.5, %v1834
    %v1836 = vsub.f32 1.5, %v1835
    %v1837 = vmul.f32 %v1832, %v1836
    %vm1838 = vweird.f32 %v1831
    %vm1839 = vweird.f32 %v1832
    %vm1840 = vmor %vm1838, %vm1839
    %v1841 = vsel %vm1840, %v1832, %v1837
    %v1843 = vrot.slane %v1841, 1
    %v1844 = vrot.slane %v1841, 2
    %v1845 = vrot.slane %v1841, 3
    %v1846 = vrot.slane %v1841, 4
    %v1847 = vrot.slane %v1841, 5
    %v1848 = vrot.slane %v1841, 6
    %v1849 = vrot.slane %v1841, 7
    %v1858 = vmul.f32 %v1274, %v1841
    %v1859 = vmul.f32 %v1280, %v1841
    %v1860 = vmul.f32 %v1286, %v1841
    %v1861 = vmul.f32 %v1292, %v1843
    %v1862 = vmul.f32 %v1298, %v1843
    %v1863 = vmul.f32 %v1304, %v1843
    %v1864 = vmul.f32 %v1310, %v1844
    %v1865 = vmul.f32 %v1316, %v1844
    %v1866 = vmul.f32 %v1322, %v1844
    %v1867 = vmul.f32 %v1328, %v1845
    %v1868 = vmul.f32 %v1334, %v1845
    %v1869 = vmul.f32 %v1340, %v1845
    %v1870 = vmul.f32 %v1346, %v1846
    %v1871 = vmul.f32 %v1352, %v1846
    %v1872 = vmul.f32 %v1358, %v1846
    %v1873 = vmul.f32 %v1364, %v1847
    %v1874 = vmul.f32 %v1370, %v1847
    %v1875 = vmul.f32 %v1376, %v1847
    %v1876 = vmul.f32 %v1382, %v1848
    %v1877 = vmul.f32 %v1388, %v1848
    %v1878 = vmul.f32 %v1394, %v1848
    %v1879 = vmul.f32 %v1400, %v1849
    %v1880 = vmul.f32 %v1406, %v1849
    %v1881 = vmul.f32 %v1412, %v1849
    %v1906 = vrot.slane %v1861, 7
    %v1907 = vsel %vm1537, %v1906, %v1858
    %v1908 = vrot.slane %v1864, 6
    %v1909 = vsel %vm1539, %v1908, %v1907
    %v1910 = vrot.slane %v1867, 5
    %v1911 = vsel %vm1541, %v1910, %v1909
    %v1912 = vrot.slane %v1870, 4
    %v1913 = vsel %vm1543, %v1912, %v1911
    %v1914 = vrot.slane %v1873, 3
    %v1915 = vsel %vm1545, %v1914, %v1913
    %v1916 = vrot.slane %v1876, 2
    %v1917 = vsel %vm1547, %v1916, %v1915
    %v1918 = vrot.slane %v1879, 1
    %v1919 = vsel %vm1549, %v1918, %v1917
    %v1920 = vrot.slane %v1862, 7
    %v1921 = vsel %vm1537, %v1920, %v1859
    %v1922 = vrot.slane %v1865, 6
    %v1923 = vsel %vm1539, %v1922, %v1921
    %v1924 = vrot.slane %v1868, 5
    %v1925 = vsel %vm1541, %v1924, %v1923
    %v1926 = vrot.slane %v1871, 4
    %v1927 = vsel %vm1543, %v1926, %v1925
    %v1928 = vrot.slane %v1874, 3
    %v1929 = vsel %vm1545, %v1928, %v1927
    %v1930 = vrot.slane %v1877, 2
    %v1931 = vsel %vm1547, %v1930, %v1929
    %v1932 = vrot.slane %v1880, 1
    %v1933 = vsel %vm1549, %v1932, %v1931
    %v1934 = vrot.slane %v1863, 7
    %v1935 = vsel %vm1537, %v1934, %v1860
    %v1936 = vrot.slane %v1866, 6
    %v1937 = vsel %vm1539, %v1936, %v1935
    %v1938 = vrot.slane %v1869, 5
    %v1939 = vsel %vm1541, %v1938, %v1937
    %v1940 = vrot.slane %v1872, 4
    %v1941 = vsel %vm1543, %v1940, %v1939
    %v1942 = vrot.slane %v1875, 3
    %v1943 = vsel %vm1545, %v1942, %v1941
    %v1944 = vrot.slane %v1878, 2
    %v1945 = vsel %vm1547, %v1944, %v1943
    %v1946 = vrot.slane %v1881, 1
    %v1947 = vsel %vm1549, %v1946, %v1945
    %1951 = vst [vmem:[#allocation11] sm:$0xff] %v1919
    %1952 = vst [vmem:[#allocation11 + $0x8] sm:$0xff] %v1933
    %1953 = vst [vmem:[#allocation11 + $0x10] sm:$0xff] %v1947
    // Predicated region
    $region38: #{tpu_custom_call.1} parent=1 // pred_check
      _
    $region39: #{tpu_custom_call.1} parent=1 // pred_check_branch
      %1955 = sbr.rel (0) target = $region41
    $region40: #{tpu_custom_call.1} parent=1 // pred_region
      %1957 = vsyncadd [#allocation4], 0
      %s1959 = sshll.u32 [#allocation10], 4
      %s1960 = int_to_ptr.vmem [resolvable:$true] %s1959
      %s1961 = sshll.u32 %s5, 4
      %s1962 = int_to_ptr.hbm [resolvable:$true] %s1961
      %1964 = dma.vmem_to_hbm [thread:$0]  %s1960, 128, %s1962, [#allocation4]
    $region41: #{tpu_custom_call.1} parent=1 // pred_fallthru
      _
    // Predicated region
    $region42: #{tpu_custom_call.1} parent=1 // pred_check
      _
    $region43: #{tpu_custom_call.1} parent=1 // pred_check_branch
      %1966 = sbr.rel (0) target = $region45
    $region44: #{tpu_custom_call.1} parent=1 // pred_region
      %1968 = vsyncadd [#allocation12], 0
      %s1970 = sshll.u32 [#allocation11], 4
      %s1971 = int_to_ptr.vmem [resolvable:$true] %s1970
      %s1972 = sshll.u32 %s6, 4
      %s1973 = int_to_ptr.hbm [resolvable:$true] %s1972
      %1975 = dma.vmem_to_hbm [thread:$0]  %s1971, 384, %s1973, [#allocation12]
    $region45: #{tpu_custom_call.1} parent=1 // pred_fallthru
      _
    // Predicated region
    $region46: #{tpu_custom_call.1} parent=1 // pred_check
      _
    $region47: #{tpu_custom_call.1} parent=1 // pred_check_branch
      %1977 = sbr.rel (0) target = $region49
    $region48: #{tpu_custom_call.1} parent=1 // pred_region
      %1979 = dma.done [#allocation4], 128
    $region49: #{tpu_custom_call.1} parent=1 // pred_fallthru
      _
    // Predicated region
    $region50: #{tpu_custom_call.1} parent=1 // pred_check
      _
    $region51: #{tpu_custom_call.1} parent=1 // pred_check_branch
      %1981 = sbr.rel (0) target = $region53
    $region52: #{tpu_custom_call.1} parent=1 // pred_region
      %1983 = dma.done [#allocation12], 384
    $region53: #{tpu_custom_call.1} parent=1 // pred_fallthru
      _
    %1984 = vsyncpa [#allocation3], 1
    %1985 = vsyncpa [#allocation6], 1
    %1986 = vsyncpa [#allocation9], 1
    %1987 = vsyncpa [#allocation4], 1
    %1988 = vsyncpa [#allocation12], 1

</llo_original>
